<compile_context>
chip_gen: v5e
topology: v5e:2x2
jax: 0.10.0
libtpu: 0.0.40
codegen_flags: <defaults>
</compile_context>

<pallas_src>
import math
from functools import partial

import jax
import jax.numpy as jnp
from jax.experimental import pallas as pl
from jax.experimental.pallas import tpu as pltpu


def _mha_kernel(num_heads,
                x_ref, wq_ref, bq_ref, wk_ref, bk_ref, wv_ref, bv_ref,
                wo_ref, bo_ref, o_ref, k_scratch, v_scratch):
    """One (batch, query-tile) grid step. x_ref is the full [N,E] sequence."""
    H = num_heads
    N, E = x_ref.shape            # squeezed block: full sequence of current batch
    TQ = o_ref.shape[0]           # squeezed block: [TQ, E]
    D = E // H

    qi = pl.program_id(1)

    # ---- K/V hoist: once per batch, lane-dense [N,E]@[E,E] projections ----
    @pl.when(qi == 0)
    def _():
        xs = x_ref[...].astype(jnp.bfloat16)                               # [N, E]
        k_scratch[...] = (jnp.dot(xs, wk_ref[...],
                                  preferred_element_type=jnp.float32)
                          + bk_ref[...]).astype(jnp.bfloat16)
        v_scratch[...] = (jnp.dot(xs, wv_ref[...],
                                  preferred_element_type=jnp.float32)
                          + bv_ref[...]).astype(jnp.bfloat16)

    # ---- Query projection for this tile (1/sqrt(E) folded into wq/bq) ----
    start = pl.multiple_of(qi * TQ, TQ)
    xq = x_ref[pl.ds(start, TQ), :].astype(jnp.bfloat16)                   # [TQ, E]
    q = (jnp.dot(xq, wq_ref[...], preferred_element_type=jnp.float32)
         + bq_ref[...]).astype(jnp.bfloat16)                               # [TQ, E]

    # ---- Per-head attention: 2-D dots on lane slices, no broadcasts ----
    outs = []
    for h in range(H):
        sl = slice(h * D, (h + 1) * D)
        q_h = q[:, sl]                                                     # [TQ, D]
        k_h = k_scratch[:, sl]                                             # [N, D]
        v_h = v_scratch[:, sl]                                             # [N, D]

        s = jnp.einsum('qd,kd->qk', q_h, k_h,
                       preferred_element_type=jnp.float32)                 # [TQ, N]
        m = jnp.max(s, axis=-1, keepdims=True)
        p = jnp.exp(s - m)                                                 # f32
        denom = jnp.sum(p, axis=-1, keepdims=True)                         # [TQ, 1]

        o_h = jnp.einsum('qk,kd->qd', p.astype(jnp.bfloat16), v_h,
                         preferred_element_type=jnp.float32)               # [TQ, D]
        # Fold the softmax reciprocal into the small output tile, not p.
        o_h = o_h * pl.reciprocal(denom, approx=True)
        outs.append(o_h.astype(jnp.bfloat16))

    # 'b h n d -> b n (h d)' == lane concat; head sum + projection collapse
    # into one lane-dense [TQ,E]@[E,E] matmul.
    o_flat = jnp.concatenate(outs, axis=-1)                                # [TQ, E]
    out = (jnp.dot(o_flat, wo_ref[...], preferred_element_type=jnp.float32)
           + bo_ref[...])
    o_ref[...] = out.astype(o_ref.dtype)


def multi_head_attention(x, params, *, num_heads, q_block=128):
    """x: [B, N, E] f32. params: [E,E] (in-major) weights, [1,E] biases."""
    B, N, E = x.shape
    H = num_heads
    assert E % H == 0
    TQ = min(N, q_block)
    assert N % TQ == 0, "sequence length must be divisible by the query tile"
    assert TQ == N or TQ % 8 == 0, "query tile should be sublane-aligned"
    n_q = N // TQ

    scale = jnp.float32(1.0 / math.sqrt(E))

    # Host-side weight prep: scale folding + bf16 cast (halves weight DMA/VMEM).
    wq = (params["wq"] * scale).astype(jnp.bfloat16)
    bq = (params["bq"] * scale).astype(jnp.float32)
    wk = params["wk"].astype(jnp.bfloat16)
    wv = params["wv"].astype(jnp.bfloat16)
    wo = params["wo"].astype(jnp.bfloat16)
    bk = params["bk"].astype(jnp.float32)
    bv = params["bv"].astype(jnp.float32)
    bo = params["bo"].astype(jnp.float32)

    kernel = partial(_mha_kernel, H)

    def build(single_buffer_weights):
        # Constant-index weight blocks: fetched once, never re-DMA'd.
        wmode = (dict(pipeline_mode=pl.Buffered(1))
                 if single_buffer_weights else {})
        const2 = lambda b, qi: (0, 0)
        w_spec = pl.BlockSpec((E, E), const2, **wmode)
        b_spec = pl.BlockSpec((1, E), const2, **wmode)
        return pl.pallas_call(
            kernel,
            out_shape=jax.ShapeDtypeStruct((B, N, E), x.dtype),
            grid_spec=pltpu.PrefetchScalarGridSpec(
                num_scalar_prefetch=0,
                grid=(B, n_q),
                in_specs=[
                    # Full sequence per batch; constant over qi -> no re-DMA.
                    pl.BlockSpec((None, N, E), lambda b, qi: (b, 0, 0)),
                    w_spec, b_spec,   # queries
                    w_spec, b_spec,   # keys
                    w_spec, b_spec,   # values
                    w_spec, b_spec,   # projection
                ],
                out_specs=pl.BlockSpec((None, TQ, E), lambda b, qi: (b, qi, 0)),
                scratch_shapes=[
                    pltpu.VMEM((N, E), jnp.bfloat16),   # projected keys
                    pltpu.VMEM((N, E), jnp.bfloat16),   # projected values
                ],
            ),
            compiler_params=pltpu.CompilerParams(
                # qi must be "arbitrary": scratch K/V persists across query tiles.
                dimension_semantics=("parallel", "arbitrary"),
                vmem_limit_bytes=48 * 1024 * 1024),
        )

    args = (x, wq, bq, wk, bk, wv, bv, wo, bo)
    try:
        return build(True)(*args)
    except Exception:
        # TODO(synk): this JAX build rejected pipeline_mode=pl.Buffered(1) on the
        # constant weight blocks; fall back to default double-buffering.
        return build(False)(*args)


def _init_linear(key, in_features, out_features):
    """Deterministic nn.Linear-style init; weight returned as [in, out]."""
    kw, kb = jax.random.split(key)
    bound = 1.0 / math.sqrt(in_features)
    w = jax.random.uniform(kw, (in_features, out_features),
                           minval=-bound, maxval=bound, dtype=jnp.float32)
    b = jax.random.uniform(kb, (1, out_features),
                           minval=-bound, maxval=bound, dtype=jnp.float32)
    return w, b


def _reference(x, params, num_heads):
    """Pure-JAX f32 reference mirroring the PyTorch forward (mask=None, eval)."""
    B, N, E = x.shape
    D = E // num_heads
    q = x @ params["wq"] + params["bq"]
    k = x @ params["wk"] + params["bk"]
    v = x @ params["wv"] + params["bv"]
    q = q.reshape(B, N, num_heads, D).transpose(0, 2, 1, 3)
    k = k.reshape(B, N, num_heads, D).transpose(0, 2, 1, 3)
    v = v.reshape(B, N, num_heads, D).transpose(0, 2, 1, 3)
    energy = jnp.einsum('bhqd,bhkd->bhqk', q, k)
    att = jax.nn.softmax(energy / (E ** 0.5), axis=-1)
    out = jnp.einsum('bhal,bhlv->bhav', att, v)
    out = out.transpose(0, 2, 1, 3).reshape(B, N, E)
    return out @ params["wo"] + params["bo"]


def _run_case(key, B, N, E, H, q_block):
    kx, kq, kk, kv, ko = jax.random.split(key, 5)
    x = jax.random.normal(kx, (B, N, E), dtype=jnp.float32)
    wq, bq = _init_linear(kq, E, E)
    wk, bk = _init_linear(kk, E, E)
    wv, bv = _init_linear(kv, E, E)
    wo, bo = _init_linear(ko, E, E)
    params = dict(wq=wq, bq=bq, wk=wk, bk=bk, wv=wv, bv=bv, wo=wo, bo=bo)

    out = multi_head_attention(x, params, num_heads=H, q_block=q_block)
    out = jax.block_until_ready(out)
    ref = _reference(x, params, H)
    assert out.shape == (B, N, E)
    # bf16 MXU inputs + approx reciprocal vs f32 reference -> relaxed tolerance.
    assert jnp.allclose(out, ref, atol=5e-2, rtol=5e-2), (
        f"max abs err {jnp.max(jnp.abs(out - ref))}")


if __name__ == "__main__":
    key = jax.random.PRNGKey(0)
    k1, k2 = jax.random.split(key)
    # Case 1: single query tile (n_q = 1), the original toy shape.
    _run_case(k1, B=2, N=8, E=32, H=4, q_block=128)
    # Case 2: multi-tile qi path (n_q = 2) exercising the K/V-scratch reuse
    # and the dynamic query-row slice.
    _run_case(k2, B=2, N=16, E=32, H=4, q_block=8)
    print("KERNEL_OK")
</pallas_src>

<mosaic_0001>
module attributes {stable_mosaic.version = 11 : i64} {
  func.func @_mha_kernel(%arg0: i32, %arg1: i32, %arg2: memref<1x8x32xf32, #tpu.memory_space<vmem>>, %arg3: memref<32x32xbf16, #tpu.memory_space<vmem>>, %arg4: memref<1x32xf32, #tpu.memory_space<vmem>>, %arg5: memref<32x32xbf16, #tpu.memory_space<vmem>>, %arg6: memref<1x32xf32, #tpu.memory_space<vmem>>, %arg7: memref<32x32xbf16, #tpu.memory_space<vmem>>, %arg8: memref<1x32xf32, #tpu.memory_space<vmem>>, %arg9: memref<32x32xbf16, #tpu.memory_space<vmem>>, %arg10: memref<1x32xf32, #tpu.memory_space<vmem>>, %arg11: memref<1x8x32xf32, #tpu.memory_space<vmem>>, %arg12: memref<8x32xbf16, #tpu.memory_space<vmem>>, %arg13: memref<8x32xbf16, #tpu.memory_space<vmem>>) attributes {dimension_semantics = [#tpu.dimension_semantics<parallel>, #tpu.dimension_semantics<arbitrary>], iteration_bounds = array<i64: 2, 1>, scalar_prefetch = 0 : i64, scratch_operands = 2 : i64, tpu.core_type = #tpu.core_type<tc>, window_params = [{transform_indices = @transform_0, window_bounds = array<i64: 1, 8, 32>}, {pipeline_mode = #tpu.pipeline_mode<synchronous>, transform_indices = @transform_1, window_bounds = array<i64: 32, 32>}, {pipeline_mode = #tpu.pipeline_mode<synchronous>, transform_indices = @transform_2, window_bounds = array<i64: 1, 32>}, {pipeline_mode = #tpu.pipeline_mode<synchronous>, transform_indices = @transform_3, window_bounds = array<i64: 32, 32>}, {pipeline_mode = #tpu.pipeline_mode<synchronous>, transform_indices = @transform_4, window_bounds = array<i64: 1, 32>}, {pipeline_mode = #tpu.pipeline_mode<synchronous>, transform_indices = @transform_5, window_bounds = array<i64: 32, 32>}, {pipeline_mode = #tpu.pipeline_mode<synchronous>, transform_indices = @transform_6, window_bounds = array<i64: 1, 32>}, {pipeline_mode = #tpu.pipeline_mode<synchronous>, transform_indices = @transform_7, window_bounds = array<i64: 32, 32>}, {pipeline_mode = #tpu.pipeline_mode<synchronous>, transform_indices = @transform_8, window_bounds = array<i64: 1, 32>}, {transform_indices = @transform_9, window_bounds = array<i64: 1, 8, 32>}]} {
    %c0_i32 = arith.constant 0 : i32
    %0 = arith.cmpi eq, %arg1, %c0_i32 : i32
    %1 = arith.extui %0 : i1 to i32
    %c0_i32_0 = arith.constant 0 : i32
    %2 = arith.cmpi ne, %1, %c0_i32_0 : i32
    scf.if %2 {
      %c0_43 = arith.constant 0 : index
      %c0_44 = arith.constant 0 : index
      %c0_45 = arith.constant 0 : index
      %92 = vector.load %arg2[%c0_43, %c0_44, %c0_45] : memref<1x8x32xf32, #tpu.memory_space<vmem>>, vector<1x8x32xf32>
      %93 = vector.shape_cast %92 : vector<1x8x32xf32> to vector<8x32xf32>
      %94 = arith.truncf %93 : vector<8x32xf32> to vector<8x32xbf16>
      %c0_46 = arith.constant 0 : index
      %c0_47 = arith.constant 0 : index
      %95 = vector.load %arg5[%c0_46, %c0_47] : memref<32x32xbf16, #tpu.memory_space<vmem>>, vector<32x32xbf16>
      %cst_48 = arith.constant dense<0.000000e+00> : vector<8x32xf32>
      %96 = tpu.matmul %94, %95, %cst_48 {dimension_numbers = #tpu.dot_dimension_numbers<[1], [0], [0], [1], [0, 0, 1, 1], [], []>} : vector<8x32xbf16>, vector<32x32xbf16>, vector<8x32xf32> -> vector<8x32xf32>
      %c0_49 = arith.constant 0 : index
      %c0_50 = arith.constant 0 : index
      %97 = vector.load %arg6[%c0_49, %c0_50] : memref<1x32xf32, #tpu.memory_space<vmem>>, vector<1x32xf32>
      %98 = vector.broadcast %97 : vector<1x32xf32> to vector<8x32xf32>
      %99 = arith.addf %96, %98 : vector<8x32xf32>
      %100 = arith.truncf %99 : vector<8x32xf32> to vector<8x32xbf16>
      %c0_51 = arith.constant 0 : index
      %c0_52 = arith.constant 0 : index
      %101 = vector.load %arg12[%c0_51, %c0_52] : memref<8x32xbf16, #tpu.memory_space<vmem>>, vector<8x32xbf16>
      tpu.vector_store %arg12[%c0_51, %c0_52], %100 {strides = array<i32>} : memref<8x32xbf16, #tpu.memory_space<vmem>>, vector<8x32xbf16>,
      %c0_53 = arith.constant 0 : index
      %c0_54 = arith.constant 0 : index
      %102 = vector.load %arg7[%c0_53, %c0_54] : memref<32x32xbf16, #tpu.memory_space<vmem>>, vector<32x32xbf16>
      %cst_55 = arith.constant dense<0.000000e+00> : vector<8x32xf32>
      %103 = tpu.matmul %94, %102, %cst_55 {dimension_numbers = #tpu.dot_dimension_numbers<[1], [0], [0], [1], [0, 0, 1, 1], [], []>} : vector<8x32xbf16>, vector<32x32xbf16>, vector<8x32xf32> -> vector<8x32xf32>
      %c0_56 = arith.constant 0 : index
      %c0_57 = arith.constant 0 : index
      %104 = vector.load %arg8[%c0_56, %c0_57] : memref<1x32xf32, #tpu.memory_space<vmem>>, vector<1x32xf32>
      %105 = vector.broadcast %104 : vector<1x32xf32> to vector<8x32xf32>
      %106 = arith.addf %103, %105 : vector<8x32xf32>
      %107 = arith.truncf %106 : vector<8x32xf32> to vector<8x32xbf16>
      %c0_58 = arith.constant 0 : index
      %c0_59 = arith.constant 0 : index
      %108 = vector.load %arg13[%c0_58, %c0_59] : memref<8x32xbf16, #tpu.memory_space<vmem>>, vector<8x32xbf16>
      tpu.vector_store %arg13[%c0_58, %c0_59], %107 {strides = array<i32>} : memref<8x32xbf16, #tpu.memory_space<vmem>>, vector<8x32xbf16>,
    } else {
    }
    %c8_i32 = arith.constant 8 : i32
    %3 = arith.muli %arg1, %c8_i32 : i32
    %4 = tpu.assume_multiple %3, 8 : i32
    %c0 = arith.constant 0 : index
    %5 = arith.index_cast %4 : i32 to index
    %c0_1 = arith.constant 0 : index
    %6 = vector.load %arg2[%c0, %5, %c0_1] : memref<1x8x32xf32, #tpu.memory_space<vmem>>, vector<1x8x32xf32>
    %7 = vector.shape_cast %6 : vector<1x8x32xf32> to vector<8x32xf32>
    %8 = arith.truncf %7 : vector<8x32xf32> to vector<8x32xbf16>
    %c0_2 = arith.constant 0 : index
    %c0_3 = arith.constant 0 : index
    %9 = vector.load %arg3[%c0_2, %c0_3] : memref<32x32xbf16, #tpu.memory_space<vmem>>, vector<32x32xbf16>
    %cst = arith.constant dense<0.000000e+00> : vector<8x32xf32>
    %10 = tpu.matmul %8, %9, %cst {dimension_numbers = #tpu.dot_dimension_numbers<[1], [0], [0], [1], [0, 0, 1, 1], [], []>} : vector<8x32xbf16>, vector<32x32xbf16>, vector<8x32xf32> -> vector<8x32xf32>
    %c0_4 = arith.constant 0 : index
    %c0_5 = arith.constant 0 : index
    %11 = vector.load %arg4[%c0_4, %c0_5] : memref<1x32xf32, #tpu.memory_space<vmem>>, vector<1x32xf32>
    %12 = vector.broadcast %11 : vector<1x32xf32> to vector<8x32xf32>
    %13 = arith.addf %10, %12 : vector<8x32xf32>
    %14 = arith.truncf %13 : vector<8x32xf32> to vector<8x32xbf16>
    %15 = vector.extract_strided_slice %14 {offsets = [0, 0], sizes = [8, 8], strides = [1, 1]} : vector<8x32xbf16> to vector<8x8xbf16>
    %c0_6 = arith.constant 0 : index
    %c0_7 = arith.constant 0 : index
    %16 = vector.load %arg12[%c0_6, %c0_7] : memref<8x32xbf16, #tpu.memory_space<vmem>>, vector<8x8xbf16>
    %c0_8 = arith.constant 0 : index
    %c0_9 = arith.constant 0 : index
    %17 = vector.load %arg13[%c0_8, %c0_9] : memref<8x32xbf16, #tpu.memory_space<vmem>>, vector<8x8xbf16>
    "tpu.trace_start"() <{level = 10 : i32, message = "qd,kd->qk"}> : () -> ()
    %cst_10 = arith.constant dense<0.000000e+00> : vector<8x8xf32>
    %18 = tpu.matmul %15, %16, %cst_10 {dimension_numbers = #tpu.dot_dimension_numbers<[1], [1], [0], [0], [0, 0, 1, 0], [], []>} : vector<8x8xbf16>, vector<8x8xbf16>, vector<8x8xf32> -> vector<8x8xf32>
    "tpu.trace_stop"() : () -> ()
    %cst_11 = arith.constant dense<0xFF800000> : vector<8xf32>
    %19 = vector.multi_reduction <maximumf>, %18, %cst_11 [1] : vector<8x8xf32> to vector<8xf32>
    %20 = vector.shape_cast %19 : vector<8xf32> to vector<8x1xf32>
    %21 = vector.broadcast %20 : vector<8x1xf32> to vector<8x8xf32>
    %22 = arith.subf %18, %21 : vector<8x8xf32>
    %23 = math.exp %22 : vector<8x8xf32>
    %cst_12 = arith.constant dense<0.000000e+00> : vector<8xf32>
    %24 = vector.multi_reduction <add>, %23, %cst_12 [1] : vector<8x8xf32> to vector<8xf32>
    %25 = vector.shape_cast %24 : vector<8xf32> to vector<8x1xf32>
    %26 = arith.truncf %23 : vector<8x8xf32> to vector<8x8xbf16>
    "tpu.trace_start"() <{level = 10 : i32, message = "qk,kd->qd"}> : () -> ()
    %cst_13 = arith.constant dense<0.000000e+00> : vector<8x8xf32>
    %27 = tpu.matmul %26, %17, %cst_13 {dimension_numbers = #tpu.dot_dimension_numbers<[1], [0], [0], [1], [0, 0, 1, 1], [], []>} : vector<8x8xbf16>, vector<8x8xbf16>, vector<8x8xf32> -> vector<8x8xf32>
    "tpu.trace_stop"() : () -> ()
    %28 = tpu.reciprocal %25 {approx = true} : vector<8x1xf32> -> vector<8x1xf32>
    %29 = vector.broadcast %28 : vector<8x1xf32> to vector<8x8xf32>
    %30 = arith.mulf %27, %29 : vector<8x8xf32>
    %31 = arith.truncf %30 : vector<8x8xf32> to vector<8x8xbf16>
    %32 = vector.extract_strided_slice %14 {offsets = [0, 8], sizes = [8, 8], strides = [1, 1]} : vector<8x32xbf16> to vector<8x8xbf16>
    %c0_14 = arith.constant 0 : index
    %c8 = arith.constant 8 : index
    %33 = vector.load %arg12[%c0_14, %c8] : memref<8x32xbf16, #tpu.memory_space<vmem>>, vector<8x8xbf16>
    %c0_15 = arith.constant 0 : index
    %c8_16 = arith.constant 8 : index
    %34 = vector.load %arg13[%c0_15, %c8_16] : memref<8x32xbf16, #tpu.memory_space<vmem>>, vector<8x8xbf16>
    "tpu.trace_start"() <{level = 10 : i32, message = "qd,kd->qk"}> : () -> ()
    %cst_17 = arith.constant dense<0.000000e+00> : vector<8x8xf32>
    %35 = tpu.matmul %32, %33, %cst_17 {dimension_numbers = #tpu.dot_dimension_numbers<[1], [1], [0], [0], [0, 0, 1, 0], [], []>} : vector<8x8xbf16>, vector<8x8xbf16>, vector<8x8xf32> -> vector<8x8xf32>
    "tpu.trace_stop"() : () -> ()
    %cst_18 = arith.constant dense<0xFF800000> : vector<8xf32>
    %36 = vector.multi_reduction <maximumf>, %35, %cst_18 [1] : vector<8x8xf32> to vector<8xf32>
    %37 = vector.shape_cast %36 : vector<8xf32> to vector<8x1xf32>
    %38 = vector.broadcast %37 : vector<8x1xf32> to vector<8x8xf32>
    %39 = arith.subf %35, %38 : vector<8x8xf32>
    %40 = math.exp %39 : vector<8x8xf32>
    %cst_19 = arith.constant dense<0.000000e+00> : vector<8xf32>
    %41 = vector.multi_reduction <add>, %40, %cst_19 [1] : vector<8x8xf32> to vector<8xf32>
    %42 = vector.shape_cast %41 : vector<8xf32> to vector<8x1xf32>
    %43 = arith.truncf %40 : vector<8x8xf32> to vector<8x8xbf16>
    "tpu.trace_start"() <{level = 10 : i32, message = "qk,kd->qd"}> : () -> ()
    %cst_20 = arith.constant dense<0.000000e+00> : vector<8x8xf32>
    %44 = tpu.matmul %43, %34, %cst_20 {dimension_numbers = #tpu.dot_dimension_numbers<[1], [0], [0], [1], [0, 0, 1, 1], [], []>} : vector<8x8xbf16>, vector<8x8xbf16>, vector<8x8xf32> -> vector<8x8xf32>
    "tpu.trace_stop"() : () -> ()
    %45 = tpu.reciprocal %42 {approx = true} : vector<8x1xf32> -> vector<8x1xf32>
    %46 = vector.broadcast %45 : vector<8x1xf32> to vector<8x8xf32>
    %47 = arith.mulf %44, %46 : vector<8x8xf32>
    %48 = arith.truncf %47 : vector<8x8xf32> to vector<8x8xbf16>
    %49 = vector.extract_strided_slice %14 {offsets = [0, 16], sizes = [8, 8], strides = [1, 1]} : vector<8x32xbf16> to vector<8x8xbf16>
    %c0_21 = arith.constant 0 : index
    %c16 = arith.constant 16 : index
    %50 = vector.load %arg12[%c0_21, %c16] : memref<8x32xbf16, #tpu.memory_space<vmem>>, vector<8x8xbf16>
    %c0_22 = arith.constant 0 : index
    %c16_23 = arith.constant 16 : index
    %51 = vector.load %arg13[%c0_22, %c16_23] : memref<8x32xbf16, #tpu.memory_space<vmem>>, vector<8x8xbf16>
    "tpu.trace_start"() <{level = 10 : i32, message = "qd,kd->qk"}> : () -> ()
    %cst_24 = arith.constant dense<0.000000e+00> : vector<8x8xf32>
    %52 = tpu.matmul %49, %50, %cst_24 {dimension_numbers = #tpu.dot_dimension_numbers<[1], [1], [0], [0], [0, 0, 1, 0], [], []>} : vector<8x8xbf16>, vector<8x8xbf16>, vector<8x8xf32> -> vector<8x8xf32>
    "tpu.trace_stop"() : () -> ()
    %cst_25 = arith.constant dense<0xFF800000> : vector<8xf32>
    %53 = vector.multi_reduction <maximumf>, %52, %cst_25 [1] : vector<8x8xf32> to vector<8xf32>
    %54 = vector.shape_cast %53 : vector<8xf32> to vector<8x1xf32>
    %55 = vector.broadcast %54 : vector<8x1xf32> to vector<8x8xf32>
    %56 = arith.subf %52, %55 : vector<8x8xf32>
    %57 = math.exp %56 : vector<8x8xf32>
    %cst_26 = arith.constant dense<0.000000e+00> : vector<8xf32>
    %58 = vector.multi_reduction <add>, %57, %cst_26 [1] : vector<8x8xf32> to vector<8xf32>
    %59 = vector.shape_cast %58 : vector<8xf32> to vector<8x1xf32>
    %60 = arith.truncf %57 : vector<8x8xf32> to vector<8x8xbf16>
    "tpu.trace_start"() <{level = 10 : i32, message = "qk,kd->qd"}> : () -> ()
    %cst_27 = arith.constant dense<0.000000e+00> : vector<8x8xf32>
    %61 = tpu.matmul %60, %51, %cst_27 {dimension_numbers = #tpu.dot_dimension_numbers<[1], [0], [0], [1], [0, 0, 1, 1], [], []>} : vector<8x8xbf16>, vector<8x8xbf16>, vector<8x8xf32> -> vector<8x8xf32>
    "tpu.trace_stop"() : () -> ()
    %62 = tpu.reciprocal %59 {approx = true} : vector<8x1xf32> -> vector<8x1xf32>
    %63 = vector.broadcast %62 : vector<8x1xf32> to vector<8x8xf32>
    %64 = arith.mulf %61, %63 : vector<8x8xf32>
    %65 = arith.truncf %64 : vector<8x8xf32> to vector<8x8xbf16>
    %66 = vector.extract_strided_slice %14 {offsets = [0, 24], sizes = [8, 8], strides = [1, 1]} : vector<8x32xbf16> to vector<8x8xbf16>
    %c0_28 = arith.constant 0 : index
    %c24 = arith.constant 24 : index
    %67 = vector.load %arg12[%c0_28, %c24] : memref<8x32xbf16, #tpu.memory_space<vmem>>, vector<8x8xbf16>
    %c0_29 = arith.constant 0 : index
    %c24_30 = arith.constant 24 : index
    %68 = vector.load %arg13[%c0_29, %c24_30] : memref<8x32xbf16, #tpu.memory_space<vmem>>, vector<8x8xbf16>
    "tpu.trace_start"() <{level = 10 : i32, message = "qd,kd->qk"}> : () -> ()
    %cst_31 = arith.constant dense<0.000000e+00> : vector<8x8xf32>
    %69 = tpu.matmul %66, %67, %cst_31 {dimension_numbers = #tpu.dot_dimension_numbers<[1], [1], [0], [0], [0, 0, 1, 0], [], []>} : vector<8x8xbf16>, vector<8x8xbf16>, vector<8x8xf32> -> vector<8x8xf32>
    "tpu.trace_stop"() : () -> ()
    %cst_32 = arith.constant dense<0xFF800000> : vector<8xf32>
    %70 = vector.multi_reduction <maximumf>, %69, %cst_32 [1] : vector<8x8xf32> to vector<8xf32>
    %71 = vector.shape_cast %70 : vector<8xf32> to vector<8x1xf32>
    %72 = vector.broadcast %71 : vector<8x1xf32> to vector<8x8xf32>
    %73 = arith.subf %69, %72 : vector<8x8xf32>
    %74 = math.exp %73 : vector<8x8xf32>
    %cst_33 = arith.constant dense<0.000000e+00> : vector<8xf32>
    %75 = vector.multi_reduction <add>, %74, %cst_33 [1] : vector<8x8xf32> to vector<8xf32>
    %76 = vector.shape_cast %75 : vector<8xf32> to vector<8x1xf32>
    %77 = arith.truncf %74 : vector<8x8xf32> to vector<8x8xbf16>
    "tpu.trace_start"() <{level = 10 : i32, message = "qk,kd->qd"}> : () -> ()
    %cst_34 = arith.constant dense<0.000000e+00> : vector<8x8xf32>
    %78 = tpu.matmul %77, %68, %cst_34 {dimension_numbers = #tpu.dot_dimension_numbers<[1], [0], [0], [1], [0, 0, 1, 1], [], []>} : vector<8x8xbf16>, vector<8x8xbf16>, vector<8x8xf32> -> vector<8x8xf32>
    "tpu.trace_stop"() : () -> ()
    %79 = tpu.reciprocal %76 {approx = true} : vector<8x1xf32> -> vector<8x1xf32>
    %80 = vector.broadcast %79 : vector<8x1xf32> to vector<8x8xf32>
    %81 = arith.mulf %78, %80 : vector<8x8xf32>
    %82 = arith.truncf %81 : vector<8x8xf32> to vector<8x8xbf16>
    %83 = tpu.concatenate %31, %48, %65, %82 in 1 : vector<8x8xbf16>, vector<8x8xbf16>, vector<8x8xbf16>, vector<8x8xbf16> -> vector<8x32xbf16>
    %c0_35 = arith.constant 0 : index
    %c0_36 = arith.constant 0 : index
    %84 = vector.load %arg9[%c0_35, %c0_36] : memref<32x32xbf16, #tpu.memory_space<vmem>>, vector<32x32xbf16>
    %cst_37 = arith.constant dense<0.000000e+00> : vector<8x32xf32>
    %85 = tpu.matmul %83, %84, %cst_37 {dimension_numbers = #tpu.dot_dimension_numbers<[1], [0], [0], [1], [0, 0, 1, 1], [], []>} : vector<8x32xbf16>, vector<32x32xbf16>, vector<8x32xf32> -> vector<8x32xf32>
    %c0_38 = arith.constant 0 : index
    %c0_39 = arith.constant 0 : index
    %86 = vector.load %arg10[%c0_38, %c0_39] : memref<1x32xf32, #tpu.memory_space<vmem>>, vector<1x32xf32>
    %87 = vector.broadcast %86 : vector<1x32xf32> to vector<8x32xf32>
    %88 = arith.addf %85, %87 : vector<8x32xf32>
    %c0_40 = arith.constant 0 : index
    %c0_41 = arith.constant 0 : index
    %c0_42 = arith.constant 0 : index
    %89 = vector.load %arg11[%c0_40, %c0_41, %c0_42] : memref<1x8x32xf32, #tpu.memory_space<vmem>>, vector<1x8x32xf32>
    %90 = vector.shape_cast %89 : vector<1x8x32xf32> to vector<8x32xf32>
    %91 = vector.shape_cast %88 : vector<8x32xf32> to vector<1x8x32xf32>
    tpu.vector_store %arg11[%c0_40, %c0_41, %c0_42], %91 {strides = array<i32>} : memref<1x8x32xf32, #tpu.memory_space<vmem>>, vector<1x8x32xf32>,
    return
  }
  func.func @transform_0(%arg0: i32, %arg1: i32) -> (i32, i32, i32) {
    %c0_i32 = arith.constant 0 : i32
    %c0_i32_0 = arith.constant 0 : i32
    %c0_i32_1 = arith.constant 0 : i32
    return %arg0, %c0_i32, %c0_i32_0 : i32, i32, i32
  }
  func.func @transform_1(%arg0: i32, %arg1: i32) -> (i32, i32) {
    %c0_i32 = arith.constant 0 : i32
    %c0_i32_0 = arith.constant 0 : i32
    %c0_i32_1 = arith.constant 0 : i32
    return %c0_i32, %c0_i32_0 : i32, i32
  }
  func.func @transform_2(%arg0: i32, %arg1: i32) -> (i32, i32) {
    %c0_i32 = arith.constant 0 : i32
    %c0_i32_0 = arith.constant 0 : i32
    %c0_i32_1 = arith.constant 0 : i32
    return %c0_i32, %c0_i32_0 : i32, i32
  }
  func.func @transform_3(%arg0: i32, %arg1: i32) -> (i32, i32) {
    %c0_i32 = arith.constant 0 : i32
    %c0_i32_0 = arith.constant 0 : i32
    %c0_i32_1 = arith.constant 0 : i32
    return %c0_i32, %c0_i32_0 : i32, i32
  }
  func.func @transform_4(%arg0: i32, %arg1: i32) -> (i32, i32) {
    %c0_i32 = arith.constant 0 : i32
    %c0_i32_0 = arith.constant 0 : i32
    %c0_i32_1 = arith.constant 0 : i32
    return %c0_i32, %c0_i32_0 : i32, i32
  }
  func.func @transform_5(%arg0: i32, %arg1: i32) -> (i32, i32) {
    %c0_i32 = arith.constant 0 : i32
    %c0_i32_0 = arith.constant 0 : i32
    %c0_i32_1 = arith.constant 0 : i32
    return %c0_i32, %c0_i32_0 : i32, i32
  }
  func.func @transform_6(%arg0: i32, %arg1: i32) -> (i32, i32) {
    %c0_i32 = arith.constant 0 : i32
    %c0_i32_0 = arith.constant 0 : i32
    %c0_i32_1 = arith.constant 0 : i32
    return %c0_i32, %c0_i32_0 : i32, i32
  }
  func.func @transform_7(%arg0: i32, %arg1: i32) -> (i32, i32) {
    %c0_i32 = arith.constant 0 : i32
    %c0_i32_0 = arith.constant 0 : i32
    %c0_i32_1 = arith.constant 0 : i32
    return %c0_i32, %c0_i32_0 : i32, i32
  }
  func.func @transform_8(%arg0: i32, %arg1: i32) -> (i32, i32) {
    %c0_i32 = arith.constant 0 : i32
    %c0_i32_0 = arith.constant 0 : i32
    %c0_i32_1 = arith.constant 0 : i32
    return %c0_i32, %c0_i32_0 : i32, i32
  }
  func.func @transform_9(%arg0: i32, %arg1: i32) -> (i32, i32, i32) {
    %c0_i32 = arith.constant 0 : i32
    %c0_i32_0 = arith.constant 0 : i32
    return %arg0, %arg1, %c0_i32 : i32, i32, i32
  }
}

module attributes {stable_mosaic.version = 11 : i64} {
  func.func @_mha_kernel(%arg0: i32, %arg1: i32, %arg2: memref<1x8x32xf32, #tpu.memory_space<vmem>>, %arg3: memref<32x32xbf16, #tpu.memory_space<vmem>>, %arg4: memref<1x32xf32, #tpu.memory_space<vmem>>, %arg5: memref<32x32xbf16, #tpu.memory_space<vmem>>, %arg6: memref<1x32xf32, #tpu.memory_space<vmem>>, %arg7: memref<32x32xbf16, #tpu.memory_space<vmem>>, %arg8: memref<1x32xf32, #tpu.memory_space<vmem>>, %arg9: memref<32x32xbf16, #tpu.memory_space<vmem>>, %arg10: memref<1x32xf32, #tpu.memory_space<vmem>>, %arg11: memref<1x8x32xf32, #tpu.memory_space<vmem>>, %arg12: memref<8x32xbf16, #tpu.memory_space<vmem>>, %arg13: memref<8x32xbf16, #tpu.memory_space<vmem>>) attributes {dimension_semantics = [#tpu.dimension_semantics<parallel>, #tpu.dimension_semantics<arbitrary>], iteration_bounds = array<i64: 2, 1>, scalar_prefetch = 0 : i64, scratch_operands = 2 : i64, tpu.core_type = #tpu.core_type<tc>, window_params = [{transform_indices = @transform_0, window_bounds = array<i64: 1, 8, 32>}, {pipeline_mode = #tpu.pipeline_mode<synchronous>, transform_indices = @transform_1, window_bounds = array<i64: 32, 32>}, {pipeline_mode = #tpu.pipeline_mode<synchronous>, transform_indices = @transform_2, window_bounds = array<i64: 1, 32>}, {pipeline_mode = #tpu.pipeline_mode<synchronous>, transform_indices = @transform_3, window_bounds = array<i64: 32, 32>}, {pipeline_mode = #tpu.pipeline_mode<synchronous>, transform_indices = @transform_4, window_bounds = array<i64: 1, 32>}, {pipeline_mode = #tpu.pipeline_mode<synchronous>, transform_indices = @transform_5, window_bounds = array<i64: 32, 32>}, {pipeline_mode = #tpu.pipeline_mode<synchronous>, transform_indices = @transform_6, window_bounds = array<i64: 1, 32>}, {pipeline_mode = #tpu.pipeline_mode<synchronous>, transform_indices = @transform_7, window_bounds = array<i64: 32, 32>}, {pipeline_mode = #tpu.pipeline_mode<synchronous>, transform_indices = @transform_8, window_bounds = array<i64: 1, 32>}, {transform_indices = @transform_9, window_bounds = array<i64: 1, 8, 32>}]} {
    %c0_i32 = arith.constant 0 : i32
    %0 = arith.cmpi eq, %arg1, %c0_i32 : i32
    %1 = arith.extui %0 : i1 to i32
    %c0_i32_0 = arith.constant 0 : i32
    %2 = arith.cmpi ne, %1, %c0_i32_0 : i32
    scf.if %2 {
      %c0_43 = arith.constant 0 : index
      %c0_44 = arith.constant 0 : index
      %c0_45 = arith.constant 0 : index
      %92 = vector.load %arg2[%c0_43, %c0_44, %c0_45] : memref<1x8x32xf32, #tpu.memory_space<vmem>>, vector<1x8x32xf32>
      %93 = vector.shape_cast %92 : vector<1x8x32xf32> to vector<8x32xf32>
      %94 = arith.truncf %93 : vector<8x32xf32> to vector<8x32xbf16>
      %c0_46 = arith.constant 0 : index
      %c0_47 = arith.constant 0 : index
      %95 = vector.load %arg5[%c0_46, %c0_47] : memref<32x32xbf16, #tpu.memory_space<vmem>>, vector<32x32xbf16>
      %cst_48 = arith.constant dense<0.000000e+00> : vector<8x32xf32>
      %96 = tpu.matmul %94, %95, %cst_48 {dimension_numbers = #tpu.dot_dimension_numbers<[1], [0], [0], [1], [0, 0, 1, 1], [], []>} : vector<8x32xbf16>, vector<32x32xbf16>, vector<8x32xf32> -> vector<8x32xf32>
      %c0_49 = arith.constant 0 : index
      %c0_50 = arith.constant 0 : index
      %97 = vector.load %arg6[%c0_49, %c0_50] : memref<1x32xf32, #tpu.memory_space<vmem>>, vector<1x32xf32>
      %98 = vector.broadcast %97 : vector<1x32xf32> to vector<8x32xf32>
      %99 = arith.addf %96, %98 : vector<8x32xf32>
      %100 = arith.truncf %99 : vector<8x32xf32> to vector<8x32xbf16>
      %c0_51 = arith.constant 0 : index
      %c0_52 = arith.constant 0 : index
      %101 = vector.load %arg12[%c0_51, %c0_52] : memref<8x32xbf16, #tpu.memory_space<vmem>>, vector<8x32xbf16>
      tpu.vector_store %arg12[%c0_51, %c0_52], %100 {strides = array<i32>} : memref<8x32xbf16, #tpu.memory_space<vmem>>, vector<8x32xbf16>,
      %c0_53 = arith.constant 0 : index
      %c0_54 = arith.constant 0 : index
      %102 = vector.load %arg7[%c0_53, %c0_54] : memref<32x32xbf16, #tpu.memory_space<vmem>>, vector<32x32xbf16>
      %cst_55 = arith.constant dense<0.000000e+00> : vector<8x32xf32>
      %103 = tpu.matmul %94, %102, %cst_55 {dimension_numbers = #tpu.dot_dimension_numbers<[1], [0], [0], [1], [0, 0, 1, 1], [], []>} : vector<8x32xbf16>, vector<32x32xbf16>, vector<8x32xf32> -> vector<8x32xf32>
      %c0_56 = arith.constant 0 : index
      %c0_57 = arith.constant 0 : index
      %104 = vector.load %arg8[%c0_56, %c0_57] : memref<1x32xf32, #tpu.memory_space<vmem>>, vector<1x32xf32>
      %105 = vector.broadcast %104 : vector<1x32xf32> to vector<8x32xf32>
      %106 = arith.addf %103, %105 : vector<8x32xf32>
      %107 = arith.truncf %106 : vector<8x32xf32> to vector<8x32xbf16>
      %c0_58 = arith.constant 0 : index
      %c0_59 = arith.constant 0 : index
      %108 = vector.load %arg13[%c0_58, %c0_59] : memref<8x32xbf16, #tpu.memory_space<vmem>>, vector<8x32xbf16>
      tpu.vector_store %arg13[%c0_58, %c0_59], %107 {strides = array<i32>} : memref<8x32xbf16, #tpu.memory_space<vmem>>, vector<8x32xbf16>,
    } else {
    }
    %c8_i32 = arith.constant 8 : i32
    %3 = arith.muli %arg1, %c8_i32 : i32
    %4 = tpu.assume_multiple %3, 8 : i32
    %c0 = arith.constant 0 : index
    %5 = arith.index_cast %4 : i32 to index
    %c0_1 = arith.constant 0 : index
    %6 = vector.load %arg2[%c0, %5, %c0_1] : memref<1x8x32xf32, #tpu.memory_space<vmem>>, vector<1x8x32xf32>
    %7 = vector.shape_cast %6 : vector<1x8x32xf32> to vector<8x32xf32>
    %8 = arith.truncf %7 : vector<8x32xf32> to vector<8x32xbf16>
    %c0_2 = arith.constant 0 : index
    %c0_3 = arith.constant 0 : index
    %9 = vector.load %arg3[%c0_2, %c0_3] : memref<32x32xbf16, #tpu.memory_space<vmem>>, vector<32x32xbf16>
    %cst = arith.constant dense<0.000000e+00> : vector<8x32xf32>
    %10 = tpu.matmul %8, %9, %cst {dimension_numbers = #tpu.dot_dimension_numbers<[1], [0], [0], [1], [0, 0, 1, 1], [], []>} : vector<8x32xbf16>, vector<32x32xbf16>, vector<8x32xf32> -> vector<8x32xf32>
    %c0_4 = arith.constant 0 : index
    %c0_5 = arith.constant 0 : index
    %11 = vector.load %arg4[%c0_4, %c0_5] : memref<1x32xf32, #tpu.memory_space<vmem>>, vector<1x32xf32>
    %12 = vector.broadcast %11 : vector<1x32xf32> to vector<8x32xf32>
    %13 = arith.addf %10, %12 : vector<8x32xf32>
    %14 = arith.truncf %13 : vector<8x32xf32> to vector<8x32xbf16>
    %15 = vector.extract_strided_slice %14 {offsets = [0, 0], sizes = [8, 8], strides = [1, 1]} : vector<8x32xbf16> to vector<8x8xbf16>
    %c0_6 = arith.constant 0 : index
    %c0_7 = arith.constant 0 : index
    %16 = vector.load %arg12[%c0_6, %c0_7] : memref<8x32xbf16, #tpu.memory_space<vmem>>, vector<8x8xbf16>
    %c0_8 = arith.constant 0 : index
    %c0_9 = arith.constant 0 : index
    %17 = vector.load %arg13[%c0_8, %c0_9] : memref<8x32xbf16, #tpu.memory_space<vmem>>, vector<8x8xbf16>
    "tpu.trace_start"() <{level = 10 : i32, message = "qd,kd->qk"}> : () -> ()
    %cst_10 = arith.constant dense<0.000000e+00> : vector<8x8xf32>
    %18 = tpu.matmul %15, %16, %cst_10 {dimension_numbers = #tpu.dot_dimension_numbers<[1], [1], [0], [0], [0, 0, 1, 0], [], []>} : vector<8x8xbf16>, vector<8x8xbf16>, vector<8x8xf32> -> vector<8x8xf32>
    "tpu.trace_stop"() : () -> ()
    %cst_11 = arith.constant dense<0xFF800000> : vector<8xf32>
    %19 = vector.multi_reduction <maximumf>, %18, %cst_11 [1] : vector<8x8xf32> to vector<8xf32>
    %20 = vector.shape_cast %19 : vector<8xf32> to vector<8x1xf32>
    %21 = vector.broadcast %20 : vector<8x1xf32> to vector<8x8xf32>
    %22 = arith.subf %18, %21 : vector<8x8xf32>
    %23 = math.exp %22 : vector<8x8xf32>
    %cst_12 = arith.constant dense<0.000000e+00> : vector<8xf32>
    %24 = vector.multi_reduction <add>, %23, %cst_12 [1] : vector<8x8xf32> to vector<8xf32>
    %25 = vector.shape_cast %24 : vector<8xf32> to vector<8x1xf32>
    %26 = arith.truncf %23 : vector<8x8xf32> to vector<8x8xbf16>
    "tpu.trace_start"() <{level = 10 : i32, message = "qk,kd->qd"}> : () -> ()
    %cst_13 = arith.constant dense<0.000000e+00> : vector<8x8xf32>
    %27 = tpu.matmul %26, %17, %cst_13 {dimension_numbers = #tpu.dot_dimension_numbers<[1], [0], [0], [1], [0, 0, 1, 1], [], []>} : vector<8x8xbf16>, vector<8x8xbf16>, vector<8x8xf32> -> vector<8x8xf32>
    "tpu.trace_stop"() : () -> ()
    %28 = tpu.reciprocal %25 {approx = true} : vector<8x1xf32> -> vector<8x1xf32>
    %29 = vector.broadcast %28 : vector<8x1xf32> to vector<8x8xf32>
    %30 = arith.mulf %27, %29 : vector<8x8xf32>
    %31 = arith.truncf %30 : vector<8x8xf32> to vector<8x8xbf16>
    %32 = vector.extract_strided_slice %14 {offsets = [0, 8], sizes = [8, 8], strides = [1, 1]} : vector<8x32xbf16> to vector<8x8xbf16>
    %c0_14 = arith.constant 0 : index
    %c8 = arith.constant 8 : index
    %33 = vector.load %arg12[%c0_14, %c8] : memref<8x32xbf16, #tpu.memory_space<vmem>>, vector<8x8xbf16>
    %c0_15 = arith.constant 0 : index
    %c8_16 = arith.constant 8 : index
    %34 = vector.load %arg13[%c0_15, %c8_16] : memref<8x32xbf16, #tpu.memory_space<vmem>>, vector<8x8xbf16>
    "tpu.trace_start"() <{level = 10 : i32, message = "qd,kd->qk"}> : () -> ()
    %cst_17 = arith.constant dense<0.000000e+00> : vector<8x8xf32>
    %35 = tpu.matmul %32, %33, %cst_17 {dimension_numbers = #tpu.dot_dimension_numbers<[1], [1], [0], [0], [0, 0, 1, 0], [], []>} : vector<8x8xbf16>, vector<8x8xbf16>, vector<8x8xf32> -> vector<8x8xf32>
    "tpu.trace_stop"() : () -> ()
    %cst_18 = arith.constant dense<0xFF800000> : vector<8xf32>
    %36 = vector.multi_reduction <maximumf>, %35, %cst_18 [1] : vector<8x8xf32> to vector<8xf32>
    %37 = vector.shape_cast %36 : vector<8xf32> to vector<8x1xf32>
    %38 = vector.broadcast %37 : vector<8x1xf32> to vector<8x8xf32>
    %39 = arith.subf %35, %38 : vector<8x8xf32>
    %40 = math.exp %39 : vector<8x8xf32>
    %cst_19 = arith.constant dense<0.000000e+00> : vector<8xf32>
    %41 = vector.multi_reduction <add>, %40, %cst_19 [1] : vector<8x8xf32> to vector<8xf32>
    %42 = vector.shape_cast %41 : vector<8xf32> to vector<8x1xf32>
    %43 = arith.truncf %40 : vector<8x8xf32> to vector<8x8xbf16>
    "tpu.trace_start"() <{level = 10 : i32, message = "qk,kd->qd"}> : () -> ()
    %cst_20 = arith.constant dense<0.000000e+00> : vector<8x8xf32>
    %44 = tpu.matmul %43, %34, %cst_20 {dimension_numbers = #tpu.dot_dimension_numbers<[1], [0], [0], [1], [0, 0, 1, 1], [], []>} : vector<8x8xbf16>, vector<8x8xbf16>, vector<8x8xf32> -> vector<8x8xf32>
    "tpu.trace_stop"() : () -> ()
    %45 = tpu.reciprocal %42 {approx = true} : vector<8x1xf32> -> vector<8x1xf32>
    %46 = vector.broadcast %45 : vector<8x1xf32> to vector<8x8xf32>
    %47 = arith.mulf %44, %46 : vector<8x8xf32>
    %48 = arith.truncf %47 : vector<8x8xf32> to vector<8x8xbf16>
    %49 = vector.extract_strided_slice %14 {offsets = [0, 16], sizes = [8, 8], strides = [1, 1]} : vector<8x32xbf16> to vector<8x8xbf16>
    %c0_21 = arith.constant 0 : index
    %c16 = arith.constant 16 : index
    %50 = vector.load %arg12[%c0_21, %c16] : memref<8x32xbf16, #tpu.memory_space<vmem>>, vector<8x8xbf16>
    %c0_22 = arith.constant 0 : index
    %c16_23 = arith.constant 16 : index
    %51 = vector.load %arg13[%c0_22, %c16_23] : memref<8x32xbf16, #tpu.memory_space<vmem>>, vector<8x8xbf16>
    "tpu.trace_start"() <{level = 10 : i32, message = "qd,kd->qk"}> : () -> ()
    %cst_24 = arith.constant dense<0.000000e+00> : vector<8x8xf32>
    %52 = tpu.matmul %49, %50, %cst_24 {dimension_numbers = #tpu.dot_dimension_numbers<[1], [1], [0], [0], [0, 0, 1, 0], [], []>} : vector<8x8xbf16>, vector<8x8xbf16>, vector<8x8xf32> -> vector<8x8xf32>
    "tpu.trace_stop"() : () -> ()
    %cst_25 = arith.constant dense<0xFF800000> : vector<8xf32>
    %53 = vector.multi_reduction <maximumf>, %52, %cst_25 [1] : vector<8x8xf32> to vector<8xf32>
    %54 = vector.shape_cast %53 : vector<8xf32> to vector<8x1xf32>
    %55 = vector.broadcast %54 : vector<8x1xf32> to vector<8x8xf32>
    %56 = arith.subf %52, %55 : vector<8x8xf32>
    %57 = math.exp %56 : vector<8x8xf32>
    %cst_26 = arith.constant dense<0.000000e+00> : vector<8xf32>
    %58 = vector.multi_reduction <add>, %57, %cst_26 [1] : vector<8x8xf32> to vector<8xf32>
    %59 = vector.shape_cast %58 : vector<8xf32> to vector<8x1xf32>
    %60 = arith.truncf %57 : vector<8x8xf32> to vector<8x8xbf16>
    "tpu.trace_start"() <{level = 10 : i32, message = "qk,kd->qd"}> : () -> ()
    %cst_27 = arith.constant dense<0.000000e+00> : vector<8x8xf32>
    %61 = tpu.matmul %60, %51, %cst_27 {dimension_numbers = #tpu.dot_dimension_numbers<[1], [0], [0], [1], [0, 0, 1, 1], [], []>} : vector<8x8xbf16>, vector<8x8xbf16>, vector<8x8xf32> -> vector<8x8xf32>
    "tpu.trace_stop"() : () -> ()
    %62 = tpu.reciprocal %59 {approx = true} : vector<8x1xf32> -> vector<8x1xf32>
    %63 = vector.broadcast %62 : vector<8x1xf32> to vector<8x8xf32>
    %64 = arith.mulf %61, %63 : vector<8x8xf32>
    %65 = arith.truncf %64 : vector<8x8xf32> to vector<8x8xbf16>
    %66 = vector.extract_strided_slice %14 {offsets = [0, 24], sizes = [8, 8], strides = [1, 1]} : vector<8x32xbf16> to vector<8x8xbf16>
    %c0_28 = arith.constant 0 : index
    %c24 = arith.constant 24 : index
    %67 = vector.load %arg12[%c0_28, %c24] : memref<8x32xbf16, #tpu.memory_space<vmem>>, vector<8x8xbf16>
    %c0_29 = arith.constant 0 : index
    %c24_30 = arith.constant 24 : index
    %68 = vector.load %arg13[%c0_29, %c24_30] : memref<8x32xbf16, #tpu.memory_space<vmem>>, vector<8x8xbf16>
    "tpu.trace_start"() <{level = 10 : i32, message = "qd,kd->qk"}> : () -> ()
    %cst_31 = arith.constant dense<0.000000e+00> : vector<8x8xf32>
    %69 = tpu.matmul %66, %67, %cst_31 {dimension_numbers = #tpu.dot_dimension_numbers<[1], [1], [0], [0], [0, 0, 1, 0], [], []>} : vector<8x8xbf16>, vector<8x8xbf16>, vector<8x8xf32> -> vector<8x8xf32>
    "tpu.trace_stop"() : () -> ()
    %cst_32 = arith.constant dense<0xFF800000> : vector<8xf32>
    %70 = vector.multi_reduction <maximumf>, %69, %cst_32 [1] : vector<8x8xf32> to vector<8xf32>
    %71 = vector.shape_cast %70 : vector<8xf32> to vector<8x1xf32>
    %72 = vector.broadcast %71 : vector<8x1xf32> to vector<8x8xf32>
    %73 = arith.subf %69, %72 : vector<8x8xf32>
    %74 = math.exp %73 : vector<8x8xf32>
    %cst_33 = arith.constant dense<0.000000e+00> : vector<8xf32>
    %75 = vector.multi_reduction <add>, %74, %cst_33 [1] : vector<8x8xf32> to vector<8xf32>
    %76 = vector.shape_cast %75 : vector<8xf32> to vector<8x1xf32>
    %77 = arith.truncf %74 : vector<8x8xf32> to vector<8x8xbf16>
    "tpu.trace_start"() <{level = 10 : i32, message = "qk,kd->qd"}> : () -> ()
    %cst_34 = arith.constant dense<0.000000e+00> : vector<8x8xf32>
    %78 = tpu.matmul %77, %68, %cst_34 {dimension_numbers = #tpu.dot_dimension_numbers<[1], [0], [0], [1], [0, 0, 1, 1], [], []>} : vector<8x8xbf16>, vector<8x8xbf16>, vector<8x8xf32> -> vector<8x8xf32>
    "tpu.trace_stop"() : () -> ()
    %79 = tpu.reciprocal %76 {approx = true} : vector<8x1xf32> -> vector<8x1xf32>
    %80 = vector.broadcast %79 : vector<8x1xf32> to vector<8x8xf32>
    %81 = arith.mulf %78, %80 : vector<8x8xf32>
    %82 = arith.truncf %81 : vector<8x8xf32> to vector<8x8xbf16>
    %83 = tpu.concatenate %31, %48, %65, %82 in 1 : vector<8x8xbf16>, vector<8x8xbf16>, vector<8x8xbf16>, vector<8x8xbf16> -> vector<8x32xbf16>
    %c0_35 = arith.constant 0 : index
    %c0_36 = arith.constant 0 : index
    %84 = vector.load %arg9[%c0_35, %c0_36] : memref<32x32xbf16, #tpu.memory_space<vmem>>, vector<32x32xbf16>
    %cst_37 = arith.constant dense<0.000000e+00> : vector<8x32xf32>
    %85 = tpu.matmul %83, %84, %cst_37 {dimension_numbers = #tpu.dot_dimension_numbers<[1], [0], [0], [1], [0, 0, 1, 1], [], []>} : vector<8x32xbf16>, vector<32x32xbf16>, vector<8x32xf32> -> vector<8x32xf32>
    %c0_38 = arith.constant 0 : index
    %c0_39 = arith.constant 0 : index
    %86 = vector.load %arg10[%c0_38, %c0_39] : memref<1x32xf32, #tpu.memory_space<vmem>>, vector<1x32xf32>
    %87 = vector.broadcast %86 : vector<1x32xf32> to vector<8x32xf32>
    %88 = arith.addf %85, %87 : vector<8x32xf32>
    %c0_40 = arith.constant 0 : index
    %c0_41 = arith.constant 0 : index
    %c0_42 = arith.constant 0 : index
    %89 = vector.load %arg11[%c0_40, %c0_41, %c0_42] : memref<1x8x32xf32, #tpu.memory_space<vmem>>, vector<1x8x32xf32>
    %90 = vector.shape_cast %89 : vector<1x8x32xf32> to vector<8x32xf32>
    %91 = vector.shape_cast %88 : vector<8x32xf32> to vector<1x8x32xf32>
    tpu.vector_store %arg11[%c0_40, %c0_41, %c0_42], %91 {strides = array<i32>} : memref<1x8x32xf32, #tpu.memory_space<vmem>>, vector<1x8x32xf32>,
    return
  }
  func.func @transform_0(%arg0: i32, %arg1: i32) -> (i32, i32, i32) {
    %c0_i32 = arith.constant 0 : i32
    %c0_i32_0 = arith.constant 0 : i32
    %c0_i32_1 = arith.constant 0 : i32
    return %arg0, %c0_i32, %c0_i32_0 : i32, i32, i32
  }
  func.func @transform_1(%arg0: i32, %arg1: i32) -> (i32, i32) {
    %c0_i32 = arith.constant 0 : i32
    %c0_i32_0 = arith.constant 0 : i32
    %c0_i32_1 = arith.constant 0 : i32
    return %c0_i32, %c0_i32_0 : i32, i32
  }
  func.func @transform_2(%arg0: i32, %arg1: i32) -> (i32, i32) {
    %c0_i32 = arith.constant 0 : i32
    %c0_i32_0 = arith.constant 0 : i32
    %c0_i32_1 = arith.constant 0 : i32
    return %c0_i32, %c0_i32_0 : i32, i32
  }
  func.func @transform_3(%arg0: i32, %arg1: i32) -> (i32, i32) {
    %c0_i32 = arith.constant 0 : i32
    %c0_i32_0 = arith.constant 0 : i32
    %c0_i32_1 = arith.constant 0 : i32
    return %c0_i32, %c0_i32_0 : i32, i32
  }
  func.func @transform_4(%arg0: i32, %arg1: i32) -> (i32, i32) {
    %c0_i32 = arith.constant 0 : i32
    %c0_i32_0 = arith.constant 0 : i32
    %c0_i32_1 = arith.constant 0 : i32
    return %c0_i32, %c0_i32_0 : i32, i32
  }
  func.func @transform_5(%arg0: i32, %arg1: i32) -> (i32, i32) {
    %c0_i32 = arith.constant 0 : i32
    %c0_i32_0 = arith.constant 0 : i32
    %c0_i32_1 = arith.constant 0 : i32
    return %c0_i32, %c0_i32_0 : i32, i32
  }
  func.func @transform_6(%arg0: i32, %arg1: i32) -> (i32, i32) {
    %c0_i32 = arith.constant 0 : i32
    %c0_i32_0 = arith.constant 0 : i32
    %c0_i32_1 = arith.constant 0 : i32
    return %c0_i32, %c0_i32_0 : i32, i32
  }
  func.func @transform_7(%arg0: i32, %arg1: i32) -> (i32, i32) {
    %c0_i32 = arith.constant 0 : i32
    %c0_i32_0 = arith.constant 0 : i32
    %c0_i32_1 = arith.constant 0 : i32
    return %c0_i32, %c0_i32_0 : i32, i32
  }
  func.func @transform_8(%arg0: i32, %arg1: i32) -> (i32, i32) {
    %c0_i32 = arith.constant 0 : i32
    %c0_i32_0 = arith.constant 0 : i32
    %c0_i32_1 = arith.constant 0 : i32
    return %c0_i32, %c0_i32_0 : i32, i32
  }
  func.func @transform_9(%arg0: i32, %arg1: i32) -> (i32, i32, i32) {
    %c0_i32 = arith.constant 0 : i32
    %c0_i32_0 = arith.constant 0 : i32
    return %arg0, %arg1, %c0_i32 : i32, i32, i32
  }
}

</mosaic_0001>

<llo_original>
// kernel: tpu_custom_call.1
$region0: #{tpu_custom_call.1}
  #allocation0 [shape = 'u32[]', space=smem, size = 0x4, offset = 0x4, fixed_abs, tag = 'smem constant byte address 0x4 - core index']
  #allocation1 [shape = 'u32[72,128]{1,0:T(1,128)}', space=vmem, size = 0x9000, scoped, tag = 'internal scratch']
  #allocation2 [shape = 'bf16[8,32]{1,0:T(8,128)(2,1)}', space=vmem, size = 0x800, scoped, tag = 'scratch operand']
  #allocation3 [shape = 'bf16[8,32]{1,0:T(8,128)(2,1)}', space=vmem, size = 0x800, scoped, tag = 'scratch operand']
  %s0 = inlined_call_operand.hbm [shape: f32[2,8,32], index: 0, kind: input, shape index: {}]
  %s1 = inlined_call_operand.hbm [shape: bf16[32,32], index: 1, kind: input, shape index: {}]
  %s2 = inlined_call_operand.vmem [shape: f32[1,32], index: 2, kind: input, shape index: {}]
  %s3 = inlined_call_operand.hbm [shape: bf16[32,32], index: 3, kind: input, shape index: {}]
  %s4 = inlined_call_operand.vmem [shape: f32[1,32], index: 4, kind: input, shape index: {}]
  %s5 = inlined_call_operand.hbm [shape: bf16[32,32], index: 5, kind: input, shape index: {}]
  %s6 = inlined_call_operand.vmem [shape: f32[1,32], index: 6, kind: input, shape index: {}]
  %s7 = inlined_call_operand.hbm [shape: bf16[32,32], index: 7, kind: input, shape index: {}]
  %s8 = inlined_call_operand.vmem [shape: f32[1,32], index: 8, kind: input, shape index: {}]
  %s9 = inlined_call_operand.hbm [shape: f32[2,8,32], index: 9, kind: output, shape index: {}]
  %s10 = sld [smem:[#allocation0]]
  $region93: #{tpu_custom_call.1} parent=0
    _
  %s12 = ssub.s32 1, %s10
  %s13 = scalar_select 0, %s12, %s10
  $region1: #{tpu_custom_call.1} parent=0
    #allocation4 [shape = 'u8[8192]{0}', space=vmem, size = 0x2000, scoped, tag = 'input window, operand 0']
    #allocation5 [shape = 's32[2]{0}', space=sflag, size = 0x8, scoped, tag = 'scoped memory for tpu_custom_call.1']
    #allocation6 [shape = 's32[2]{0}', space=sflag, size = 0x8, scoped, tag = 'scoped memory for tpu_custom_call.1']
    #allocation7 [shape = 'u8[8192]{0}', space=vmem, size = 0x2000, scoped, tag = 'input window, operand 1, single buffered']
    #allocation8 [shape = 's32[1]{0}', space=sflag, size = 0x4, scoped, tag = 'scoped memory for tpu_custom_call.1']
    #allocation9 [shape = 'u8[8192]{0}', space=vmem, size = 0x2000, scoped, tag = 'input window, operand 3, single buffered']
    #allocation10 [shape = 'u8[8192]{0}', space=vmem, size = 0x2000, scoped, tag = 'input window, operand 5, single buffered']
    #allocation11 [shape = 's32[1]{0}', space=sflag, size = 0x4, scoped, tag = 'scoped memory for tpu_custom_call.1']
    #allocation12 [shape = 'u8[8192]{0}', space=vmem, size = 0x2000, scoped, tag = 'input window, operand 7, single buffered']
    #allocation13 [shape = 'u8[8192]{0}', space=vmem, size = 0x2000, scoped, tag = 'output window, operand 0']
    %14 = vsyncpa [#allocation5], 0
    %s15 = scalar_lea.sflag [#allocation5], 1
    %16 = vsyncpa %s15, 0
    %17 = vsyncpa [#allocation8], 0
    %18 = vsyncpa [#allocation11], 0
    %19 = vsyncpa [#allocation6], 0
    %s20 = scalar_lea.sflag [#allocation6], 1
    %21 = vsyncpa %s20, 0
    loop: start=0, step=1, limit=4
    $region2: #{tpu_custom_call.1} parent=1 // loop_pre_header
      _
    $region3: #{tpu_custom_call.1} parent=1 // loop_header
      %s23 = sphi 0, %s27
      %p24 = scmp.ge.s32.totalorder %s23, 4
      %s30 = sphi 0, %s42
      %s31 = sphi 0, %s38
      %s32 = sphi 0, %s30
      %s33 = sphi 0, %s31
      %s34 = sphi 0, %s32
      %s35 = sphi 0, %s33
      %s45 = sphi 0, %s47
      %s48 = sphi 0, %s45
      %s49 = sphi 0, %s48
      %s65 = sphi 0, %s49
      %s69 = sphi 0, %s69
      %s71 = sphi 0, %s69
      %s72 = sphi 0, %s71
      %s86 = sphi 0, %s72
      %s90 = sphi 0, %s90
      %s92 = sphi 0, %s90
      %s93 = sphi 0, %s92
      %s107 = sphi 0, %s93
      %s111 = sphi 0, %s111
      %s113 = sphi 0, %s111
      %s114 = sphi 0, %s113
      %s128 = sphi 0, %s114
      %s132 = sphi 0, %s132
      %s134 = sphi 0, %s132
      %s135 = sphi 0, %s134
      %s149 = sphi 0, %s135
      %s153 = sphi 0, %s153
      %s155 = sphi 0, %s153
      %s156 = sphi 0, %s155
      %s170 = sphi 0, %s156
      %s174 = sphi 0, %s174
      %s176 = sphi 0, %s174
      %s177 = sphi 0, %s176
      %s191 = sphi 0, %s177
      %s195 = sphi 0, %s195
      %s197 = sphi 0, %s195
      %s198 = sphi 0, %s197
      %s212 = sphi 0, %s198
      %s216 = sphi 0, %s216
      %s218 = sphi 0, %s216
      %s219 = sphi 0, %s218
      %s233 = sphi 0, %s219
      %s241 = sphi 0, %s243
      %s244 = sphi 0, %s241
      %s245 = sphi 0, %s244
      %s261 = sphi 0, %s245
    $region4: #{tpu_custom_call.1} parent=1 // loop_header_branch
      %26 = sbr.rel (%p24) target = $region8
    $region5: #{tpu_custom_call.1} parent=1 // loop_body
      %s28 = ssub.s32 %s23, 1
      %s29 = ssub.s32 %s23, 2
      %s36 = sadd.s32 1, %s31
      %p37 = scmp.ge.s32.totalorder %s36, 1
      %s38 = scalar_select %p37, 0, %s36
      %s39 = sadd.s32 1, %s30
      %s40 = scalar_select %p37, %s39, %s30
      %p41 = scmp.ge.s32.totalorder %s40, 2
      %s42 = scalar_select %p41, 0, %s40
      %s43 = ssub.s32 %s30, %s42
      %p44 = scmp.eq.s32.totalorder %s43, 0
      %s46 = sadd.s32 %s45, 1
      %s47 = scalar_select %p44, %s45, %s46
      %p50 = pneg %p44
      %p51 = scmp.eq.s32.totalorder %s23, 1
      %p52 = por %p50, %p51
      %p53 = scmp.ne.s32.totalorder %s45, %s48
      %p54 = scmp.eq.s32.totalorder %s23, 0
      %p55 = por %p53, %p54
      %p56 = scmp.ne.s32.totalorder %s45, %s48
      %p57 = scmp.eq.s32.totalorder %s28, 1
      %p58 = por %p56, %p57
      %p59 = scmp.ne.s32.totalorder %s48, %s49
      %p60 = scmp.eq.s32.totalorder %s28, 0
      %p61 = por %p59, %p60
      %p62 = scmp.ne.s32.totalorder %s48, %s49
      %p63 = scmp.eq.s32.totalorder %s29, 1
      %p64 = por %p62, %p63
      %p66 = scmp.ne.s32.totalorder %s49, %s65
      %p67 = scmp.eq.s32.totalorder %s29, 0
      %p68 = por %p66, %p67
      %s70 = sadd.s32 %s69, 1
      %p73 = scmp.eq.s32.totalorder %s23, 1
      %p74 = scmp.ne.s32.totalorder %s69, %s71
      %p75 = scmp.eq.s32.totalorder %s23, 0
      %p76 = por %p74, %p75
      %p77 = scmp.ne.s32.totalorder %s69, %s71
      %p78 = scmp.eq.s32.totalorder %s28, 1
      %p79 = por %p77, %p78
      %p80 = scmp.ne.s32.totalorder %s71, %s72
      %p81 = scmp.eq.s32.totalorder %s28, 0
      %p82 = por %p80, %p81
      %p83 = scmp.ne.s32.totalorder %s71, %s72
      %p84 = scmp.eq.s32.totalorder %s29, 1
      %p85 = por %p83, %p84
      %p87 = scmp.ne.s32.totalorder %s72, %s86
      %p88 = scmp.eq.s32.totalorder %s29, 0
      %p89 = por %p87, %p88
      %s91 = sadd.s32 %s90, 1
      %p94 = scmp.eq.s32.totalorder %s23, 1
      %p95 = scmp.ne.s32.totalorder %s90, %s92
      %p96 = scmp.eq.s32.totalorder %s23, 0
      %p97 = por %p95, %p96
      %p98 = scmp.ne.s32.totalorder %s90, %s92
      %p99 = scmp.eq.s32.totalorder %s28, 1
      %p100 = por %p98, %p99
      %p101 = scmp.ne.s32.totalorder %s92, %s93
      %p102 = scmp.eq.s32.totalorder %s28, 0
      %p103 = por %p101, %p102
      %p104 = scmp.ne.s32.totalorder %s92, %s93
      %p105 = scmp.eq.s32.totalorder %s29, 1
      %p106 = por %p104, %p105
      %p108 = scmp.ne.s32.totalorder %s93, %s107
      %p109 = scmp.eq.s32.totalorder %s29, 0
      %p110 = por %p108, %p109
      %s112 = sadd.s32 %s111, 1
      %p115 = scmp.eq.s32.totalorder %s23, 1
      %p116 = scmp.ne.s32.totalorder %s111, %s113
      %p117 = scmp.eq.s32.totalorder %s23, 0
      %p118 = por %p116, %p117
      %p119 = scmp.ne.s32.totalorder %s111, %s113
      %p120 = scmp.eq.s32.totalorder %s28, 1
      %p121 = por %p119, %p120
      %p122 = scmp.ne.s32.totalorder %s113, %s114
      %p123 = scmp.eq.s32.totalorder %s28, 0
      %p124 = por %p122, %p123
      %p125 = scmp.ne.s32.totalorder %s113, %s114
      %p126 = scmp.eq.s32.totalorder %s29, 1
      %p127 = por %p125, %p126
      %p129 = scmp.ne.s32.totalorder %s114, %s128
      %p130 = scmp.eq.s32.totalorder %s29, 0
      %p131 = por %p129, %p130
      %s133 = sadd.s32 %s132, 1
      %p136 = scmp.eq.s32.totalorder %s23, 1
      %p137 = scmp.ne.s32.totalorder %s132, %s134
      %p138 = scmp.eq.s32.totalorder %s23, 0
      %p139 = por %p137, %p138
      %p140 = scmp.ne.s32.totalorder %s132, %s134
      %p141 = scmp.eq.s32.totalorder %s28, 1
      %p142 = por %p140, %p141
      %p143 = scmp.ne.s32.totalorder %s134, %s135
      %p144 = scmp.eq.s32.totalorder %s28, 0
      %p145 = por %p143, %p144
      %p146 = scmp.ne.s32.totalorder %s134, %s135
      %p147 = scmp.eq.s32.totalorder %s29, 1
      %p148 = por %p146, %p147
      %p150 = scmp.ne.s32.totalorder %s135, %s149
      %p151 = scmp.eq.s32.totalorder %s29, 0
      %p152 = por %p150, %p151
      %s154 = sadd.s32 %s153, 1
      %p157 = scmp.eq.s32.totalorder %s23, 1
      %p158 = scmp.ne.s32.totalorder %s153, %s155
      %p159 = scmp.eq.s32.totalorder %s23, 0
      %p160 = por %p158, %p159
      %p161 = scmp.ne.s32.totalorder %s153, %s155
      %p162 = scmp.eq.s32.totalorder %s28, 1
      %p163 = por %p161, %p162
      %p164 = scmp.ne.s32.totalorder %s155, %s156
      %p165 = scmp.eq.s32.totalorder %s28, 0
      %p166 = por %p164, %p165
      %p167 = scmp.ne.s32.totalorder %s155, %s156
      %p168 = scmp.eq.s32.totalorder %s29, 1
      %p169 = por %p167, %p168
      %p171 = scmp.ne.s32.totalorder %s156, %s170
      %p172 = scmp.eq.s32.totalorder %s29, 0
      %p173 = por %p171, %p172
      %s175 = sadd.s32 %s174, 1
      %p178 = scmp.eq.s32.totalorder %s23, 1
      %p179 = scmp.ne.s32.totalorder %s174, %s176
      %p180 = scmp.eq.s32.totalorder %s23, 0
      %p181 = por %p179, %p180
      %p182 = scmp.ne.s32.totalorder %s174, %s176
      %p183 = scmp.eq.s32.totalorder %s28, 1
      %p184 = por %p182, %p183
      %p185 = scmp.ne.s32.totalorder %s176, %s177
      %p186 = scmp.eq.s32.totalorder %s28, 0
      %p187 = por %p185, %p186
      %p188 = scmp.ne.s32.totalorder %s176, %s177
      %p189 = scmp.eq.s32.totalorder %s29, 1
      %p190 = por %p188, %p189
      %p192 = scmp.ne.s32.totalorder %s177, %s191
      %p193 = scmp.eq.s32.totalorder %s29, 0
      %p194 = por %p192, %p193
      %s196 = sadd.s32 %s195, 1
      %p199 = scmp.eq.s32.totalorder %s23, 1
      %p200 = scmp.ne.s32.totalorder %s195, %s197
      %p201 = scmp.eq.s32.totalorder %s23, 0
      %p202 = por %p200, %p201
      %p203 = scmp.ne.s32.totalorder %s195, %s197
      %p204 = scmp.eq.s32.totalorder %s28, 1
      %p205 = por %p203, %p204
      %p206 = scmp.ne.s32.totalorder %s197, %s198
      %p207 = scmp.eq.s32.totalorder %s28, 0
      %p208 = por %p206, %p207
      %p209 = scmp.ne.s32.totalorder %s197, %s198
      %p210 = scmp.eq.s32.totalorder %s29, 1
      %p211 = por %p209, %p210
      %p213 = scmp.ne.s32.totalorder %s198, %s212
      %p214 = scmp.eq.s32.totalorder %s29, 0
      %p215 = por %p213, %p214
      %s217 = sadd.s32 %s216, 1
      %p220 = scmp.eq.s32.totalorder %s23, 1
      %p221 = scmp.ne.s32.totalorder %s216, %s218
      %p222 = scmp.eq.s32.totalorder %s23, 0
      %p223 = por %p221, %p222
      %p224 = scmp.ne.s32.totalorder %s216, %s218
      %p225 = scmp.eq.s32.totalorder %s28, 1
      %p226 = por %p224, %p225
      %p227 = scmp.ne.s32.totalorder %s218, %s219
      %p228 = scmp.eq.s32.totalorder %s28, 0
      %p229 = por %p227, %p228
      %p230 = scmp.ne.s32.totalorder %s218, %s219
      %p231 = scmp.eq.s32.totalorder %s29, 1
      %p232 = por %p230, %p231
      %p234 = scmp.ne.s32.totalorder %s219, %s233
      %p235 = scmp.eq.s32.totalorder %s29, 0
      %p236 = por %p234, %p235
      %s237 = ssub.s32 %s30, %s42
      %s238 = ssub.s32 %s31, %s38
      %s239 = sor.u32 %s237, %s238
      %p240 = scmp.eq.s32.totalorder %s239, 0
      %s242 = sadd.s32 %s241, 1
      %s243 = scalar_select %p240, %s241, %s242
      %p246 = pneg %p240
      %p247 = scmp.eq.s32.totalorder %s23, 1
      %p248 = por %p246, %p247
      %p249 = scmp.ne.s32.totalorder %s241, %s244
      %p250 = scmp.eq.s32.totalorder %s23, 0
      %p251 = por %p249, %p250
      %p252 = scmp.ne.s32.totalorder %s241, %s244
      %p253 = scmp.eq.s32.totalorder %s28, 1
      %p254 = por %p252, %p253
      %p255 = scmp.ne.s32.totalorder %s244, %s245
      %p256 = scmp.eq.s32.totalorder %s28, 0
      %p257 = por %p255, %p256
      %p258 = scmp.ne.s32.totalorder %s244, %s245
      %p259 = scmp.eq.s32.totalorder %s29, 1
      %p260 = por %p258, %p259
      %p262 = scmp.ne.s32.totalorder %s245, %s261
      %p263 = scmp.eq.s32.totalorder %s29, 0
      %p264 = por %p262, %p263
      %p265 = scmp.le.s32.totalorder 1, %s23
      %p266 = scmp.lt.s32.totalorder %s23, 3
      %p267 = pnand %p265, %p266
      %p268 = pneg %p267
      // Predicated region
      $region9: #{tpu_custom_call.1} parent=5 // pred_check
        _
      $region10: #{tpu_custom_call.1} parent=5 // pred_check_branch
        %270 = sbr.rel (%p267) target = $region12
      $region11: #{tpu_custom_call.1} parent=5 // pred_region
        %s271 = ssub.s32 %s23, 1
        // Predicated region
        $region13: #{tpu_custom_call.1} parent=11 // pred_check
          %p272 = pneg %p82
        $region14: #{tpu_custom_call.1} parent=11 // pred_check_branch
          %274 = sbr.rel (%p272) target = $region16
        $region15: #{tpu_custom_call.1} parent=11 // pred_region
          %276 = vsyncadd [#allocation8], 0
          %s277 = sshll.u32 %s1, 4
          %s278 = int_to_ptr.hbm [resolvable:$true] %s277
          %s279 = sshll.u32 [#allocation7], 4
          %s280 = int_to_ptr.vmem [resolvable:$true] %s279
          %285 = dma.hbm_to_vmem [thread:$0]  %s278, 256, %s280, [#allocation8], 64, 64, 4
        $region16: #{tpu_custom_call.1} parent=11 // pred_fallthru
          _
        // Predicated region
        $region17: #{tpu_custom_call.1} parent=11 // pred_check
          %p286 = pneg %p103
        $region18: #{tpu_custom_call.1} parent=11 // pred_check_branch
          %288 = sbr.rel (%p286) target = $region20
        $region19: #{tpu_custom_call.1} parent=11 // pred_region
          _
        $region20: #{tpu_custom_call.1} parent=11 // pred_fallthru
          _
        // Predicated region
        $region21: #{tpu_custom_call.1} parent=11 // pred_check
          %p289 = pneg %p124
        $region22: #{tpu_custom_call.1} parent=11 // pred_check_branch
          %291 = sbr.rel (%p289) target = $region24
        $region23: #{tpu_custom_call.1} parent=11 // pred_region
          %293 = vsyncadd [#allocation8], 0
          %s294 = sshll.u32 %s3, 4
          %s295 = int_to_ptr.hbm [resolvable:$true] %s294
          %s296 = sshll.u32 [#allocation9], 4
          %s297 = int_to_ptr.vmem [resolvable:$true] %s296
          %302 = dma.hbm_to_vmem [thread:$0]  %s295, 256, %s297, [#allocation8], 64, 64, 4
        $region24: #{tpu_custom_call.1} parent=11 // pred_fallthru
          _
        // Predicated region
        $region25: #{tpu_custom_call.1} parent=11 // pred_check
          %p303 = pneg %p145
        $region26: #{tpu_custom_call.1} parent=11 // pred_check_branch
          %305 = sbr.rel (%p303) target = $region28
        $region27: #{tpu_custom_call.1} parent=11 // pred_region
          _
        $region28: #{tpu_custom_call.1} parent=11 // pred_fallthru
          _
        // Predicated region
        $region29: #{tpu_custom_call.1} parent=11 // pred_check
          %p306 = pneg %p166
        $region30: #{tpu_custom_call.1} parent=11 // pred_check_branch
          %308 = sbr.rel (%p306) target = $region32
        $region31: #{tpu_custom_call.1} parent=11 // pred_region
          %310 = vsyncadd [#allocation11], 0
          %s311 = sshll.u32 %s5, 4
          %s312 = int_to_ptr.hbm [resolvable:$true] %s311
          %s313 = sshll.u32 [#allocation10], 4
          %s314 = int_to_ptr.vmem [resolvable:$true] %s313
          %319 = dma.hbm_to_vmem [thread:$0]  %s312, 256, %s314, [#allocation11], 64, 64, 4
        $region32: #{tpu_custom_call.1} parent=11 // pred_fallthru
          _
        // Predicated region
        $region33: #{tpu_custom_call.1} parent=11 // pred_check
          %p320 = pneg %p187
        $region34: #{tpu_custom_call.1} parent=11 // pred_check_branch
          %322 = sbr.rel (%p320) target = $region36
        $region35: #{tpu_custom_call.1} parent=11 // pred_region
          _
        $region36: #{tpu_custom_call.1} parent=11 // pred_fallthru
          _
        // Predicated region
        $region37: #{tpu_custom_call.1} parent=11 // pred_check
          %p323 = pneg %p208
        $region38: #{tpu_custom_call.1} parent=11 // pred_check_branch
          %325 = sbr.rel (%p323) target = $region40
        $region39: #{tpu_custom_call.1} parent=11 // pred_region
          %327 = vsyncadd [#allocation11], 0
          %s328 = sshll.u32 %s7, 4
          %s329 = int_to_ptr.hbm [resolvable:$true] %s328
          %s330 = sshll.u32 [#allocation12], 4
          %s331 = int_to_ptr.vmem [resolvable:$true] %s330
          %336 = dma.hbm_to_vmem [thread:$0]  %s329, 256, %s331, [#allocation11], 64, 64, 4
        $region40: #{tpu_custom_call.1} parent=11 // pred_fallthru
          _
        // Predicated region
        $region41: #{tpu_custom_call.1} parent=11 // pred_check
          %p337 = pneg %p229
        $region42: #{tpu_custom_call.1} parent=11 // pred_check_branch
          %339 = sbr.rel (%p337) target = $region44
        $region43: #{tpu_custom_call.1} parent=11 // pred_region
          _
        $region44: #{tpu_custom_call.1} parent=11 // pred_fallthru
          _
      $region12: #{tpu_custom_call.1} parent=5 // pred_fallthru
        _
      %p340 = scmp.lt.s32.totalorder %s23, 2
      // Predicated region
      $region45: #{tpu_custom_call.1} parent=5 // pred_check
        %p341 = pneg %p340
      $region46: #{tpu_custom_call.1} parent=5 // pred_check_branch
        %343 = sbr.rel (%p341) target = $region48
      $region47: #{tpu_custom_call.1} parent=5 // pred_region
        // Predicated region
        $region49: #{tpu_custom_call.1} parent=47 // pred_check
          %p344 = pneg %p55
        $region50: #{tpu_custom_call.1} parent=47 // pred_check_branch
          %346 = sbr.rel (%p344) target = $region52
        $region51: #{tpu_custom_call.1} parent=47 // pred_region
          %s347 = sand.u32 %s45, 1
          %s348 = scalar_lea.sflag [#allocation5], %s347
          %s349 = sand.u32 %s45, 1
          %s350 = smul.addr %s349, 8
          %s351 = scalar_lea.vmem [#allocation4], %s350
          %353 = vsyncadd %s348, 0
          %s354 = smul.addr %s30, 8
          %s355 = scalar_lea.hbm %s0, %s354
          %s357 = sshll.u32 %s355, 4
          %s358 = int_to_ptr.hbm [resolvable:$true] %s357
          %s359 = sshll.u32 %s351, 4
          %s360 = int_to_ptr.vmem [resolvable:$true] %s359
          %362 = dma.hbm_to_vmem [thread:$0]  %s358, 128, %s360, %s348
        $region52: #{tpu_custom_call.1} parent=47 // pred_fallthru
          _
      $region48: #{tpu_custom_call.1} parent=5 // pred_fallthru
        _
      %p363 = scmp.le.s32.totalorder 1, %s23
      %p364 = scmp.lt.s32.totalorder %s23, 3
      %p365 = pnand %p363, %p364
      %p366 = pneg %p365
      // Predicated region
      $region53: #{tpu_custom_call.1} parent=5 // pred_check
        _
      $region54: #{tpu_custom_call.1} parent=5 // pred_check_branch
        %368 = sbr.rel (%p365) target = $region56
      $region55: #{tpu_custom_call.1} parent=5 // pred_region
        %s369 = ssub.s32 %s23, 1
        %s370 = sand.u32 %s48, 1
        %s371 = scalar_lea.sflag [#allocation5], %s370
        %s372 = sand.u32 %s48, 1
        %s373 = smul.addr %s372, 8
        %s374 = scalar_lea.vmem [#allocation4], %s373
        // Predicated region
        $region57: #{tpu_custom_call.1} parent=55 // pred_check
          %p375 = pneg %p61
        $region58: #{tpu_custom_call.1} parent=55 // pred_check_branch
          %377 = sbr.rel (%p375) target = $region60
        $region59: #{tpu_custom_call.1} parent=55 // pred_region
          %379 = dma.done %s371, 128
        $region60: #{tpu_custom_call.1} parent=55 // pred_fallthru
          _
        // Predicated region
        $region61: #{tpu_custom_call.1} parent=55 // pred_check
          %p380 = pneg %p82
        $region62: #{tpu_custom_call.1} parent=55 // pred_check_branch
          %382 = sbr.rel (%p380) target = $region64
        $region63: #{tpu_custom_call.1} parent=55 // pred_region
          %384 = dma.done [#allocation8], 256
        $region64: #{tpu_custom_call.1} parent=55 // pred_fallthru
          _
        // Predicated region
        $region65: #{tpu_custom_call.1} parent=55 // pred_check
          %p385 = pneg %p124
        $region66: #{tpu_custom_call.1} parent=55 // pred_check_branch
          %387 = sbr.rel (%p385) target = $region68
        $region67: #{tpu_custom_call.1} parent=55 // pred_region
          %389 = dma.done [#allocation8], 256
        $region68: #{tpu_custom_call.1} parent=55 // pred_fallthru
          _
        // Predicated region
        $region69: #{tpu_custom_call.1} parent=55 // pred_check
          %p390 = pneg %p166
        $region70: #{tpu_custom_call.1} parent=55 // pred_check_branch
          %392 = sbr.rel (%p390) target = $region72
        $region71: #{tpu_custom_call.1} parent=55 // pred_region
          %394 = dma.done [#allocation11], 256
        $region72: #{tpu_custom_call.1} parent=55 // pred_fallthru
          _
        // Predicated region
        $region73: #{tpu_custom_call.1} parent=55 // pred_check
          %p395 = pneg %p208
        $region74: #{tpu_custom_call.1} parent=55 // pred_check_branch
          %397 = sbr.rel (%p395) target = $region76
        $region75: #{tpu_custom_call.1} parent=55 // pred_region
          %399 = dma.done [#allocation11], 256
        $region76: #{tpu_custom_call.1} parent=55 // pred_fallthru
          _
        %s400 = sand.u32 %s48, 1
        %s401 = scalar_lea.sflag [#allocation5], %s400
        %s402 = sand.u32 %s48, 1
        %s403 = smul.addr %s402, 8
        %s404 = scalar_lea.vmem [#allocation4], %s403
        %p405 = pneg %p61
        %p406 = pneg %p58
        %p407 = pneg %p82
        %p408 = pneg %p79
        %p409 = pneg %p103
        %p410 = pneg %p100
        %p411 = pneg %p124
        %p412 = pneg %p121
        %p413 = pneg %p145
        %p414 = pneg %p142
        %p415 = pneg %p166
        %p416 = pneg %p163
        %p417 = pneg %p187
        %p418 = pneg %p184
        %p419 = pneg %p208
        %p420 = pneg %p205
        %p421 = pneg %p229
        %p422 = pneg %p226
        %p423 = pneg %p257
        %p424 = pneg %p254
        %s425 = sand.u32 %s244, 1
        %s426 = scalar_lea.sflag [#allocation6], %s425
        %s427 = sand.u32 %s244, 1
        %s428 = smul.addr %s427, 8
        %s429 = scalar_lea.vmem [#allocation13], %s428
        %p431 = scmp.eq.s32.totalorder %s33, 0
        // Predicated region
        $region77: #{tpu_custom_call.1} parent=55 // pred_check
          %p432 = pneg %p431
        $region78: #{tpu_custom_call.1} parent=55 // pred_check_branch
          %434 = sbr.rel (%p432) target = $region80
        $region79: #{tpu_custom_call.1} parent=55 // pred_region
          %v435 = vld [vmem:[%s374] sm:$0xff]
          %v436 = vpack.c.bf16 %v435, %v435
          %v437 = vld [vmem:[#allocation9] sm:$0xf]
          %v438 = vld [vmem:[#allocation9 + $0x4] sm:$0xf]
          %v439 = vld [vmem:[#allocation9 + $0x8] sm:$0xf]
          %v440 = vld [vmem:[#allocation9 + $0xc] sm:$0xf]
          %v441 = vld [vmem:[%s4] sm:$0x1]
          %v443 = vperm.slane %v441, 0
          %v449 = vunpack.c.l.b16 %v437
          %v450 = vunpack.c.l.b16 %v438
          %v451 = vunpack.c.l.b16 %v439
          %v452 = vunpack.c.l.b16 %v440
          %v453 = vpack.c.b16 %v450, %v449
          %v454 = vpack.c.b16 %v452, %v451
          %vm457 = vcmask 261120
          %v459 = vsel %vm457, %v436, 0
          %461 = vmatpush.bf16.msra.mxu0 0
          %462 = vmatpush.bf16.msra.mxu0 0
          %463 = vmatpush.bf16.msra.mxu0 0
          %464 = vmatpush.bf16.msra.mxu0 0
          %465 = vmatpush.bf16.msra.mxu0 0
          %466 = vmatpush.bf16.msra.mxu0 0
          %467 = vmatpush.bf16.msra.mxu0 %v454
          %468 = vmatpush.bf16.msra.mxu0 %v453
          %469 = vmatmul.bf16.gmra.mxu0 %v459
          %v470 = vpop.f32.mrf.mxu0
          %v471 = vadd.f32 %v443, %v470
          %v472 = vpop.f32.mrf.mxu0
          %473 = vdwg.mxu0
          %v474 = vpack.c.bf16 %v471, %v471
          %vm475 = vcmask 257024
          %476 = vst.msk [vmem:[#allocation2] sm:$0xf] %vm475, %v474
          %v477 = vld [vmem:[#allocation10] sm:$0xf]
          %v478 = vld [vmem:[#allocation10 + $0x4] sm:$0xf]
          %v479 = vld [vmem:[#allocation10 + $0x8] sm:$0xf]
          %v480 = vld [vmem:[#allocation10 + $0xc] sm:$0xf]
          %v481 = vld [vmem:[%s6] sm:$0x1]
          %v483 = vperm.slane %v481, 0
          %v489 = vunpack.c.l.b16 %v477
          %v490 = vunpack.c.l.b16 %v478
          %v491 = vunpack.c.l.b16 %v479
          %v492 = vunpack.c.l.b16 %v480
          %v493 = vpack.c.b16 %v490, %v489
          %v494 = vpack.c.b16 %v492, %v491
          %497 = vmatpush.bf16.msra.mxu0 0
          %498 = vmatpush.bf16.msra.mxu0 0
          %499 = vmatpush.bf16.msra.mxu0 0
          %500 = vmatpush.bf16.msra.mxu0 0
          %501 = vmatpush.bf16.msra.mxu0 0
          %502 = vmatpush.bf16.msra.mxu0 0
          %503 = vmatpush.bf16.msra.mxu0 %v494
          %504 = vmatpush.bf16.msra.mxu0 %v493
          %505 = vmatmul.bf16.gmra.mxu0 %v459
          %v506 = vpop.f32.mrf.mxu0
          %v507 = vadd.f32 %v483, %v506
          %v508 = vpop.f32.mrf.mxu0
          %509 = vdwg.mxu0
          %v510 = vpack.c.bf16 %v507, %v507
          %511 = vst.msk [vmem:[#allocation3] sm:$0xf] %vm475, %v510
        $region80: #{tpu_custom_call.1} parent=55 // pred_fallthru
          _
        %s512 = smul.u32 %s33, 8
        %s513 = scalar_lea.vmem %s374, %s512 [#allocation4]
        %v514 = vld [vmem:[%s513] sm:$0xff]
        %v515 = vpack.c.bf16 %v514, %v514
        %v516 = vld [vmem:[#allocation7] sm:$0xf]
        %v517 = vld [vmem:[#allocation7 + $0x4] sm:$0xf]
        %v518 = vld [vmem:[#allocation7 + $0x8] sm:$0xf]
        %v519 = vld [vmem:[#allocation7 + $0xc] sm:$0xf]
        %v520 = vld [vmem:[%s2] sm:$0x1]
        %v522 = vperm.slane %v520, 0
        %v528 = vunpack.c.l.b16 %v516
        %v529 = vunpack.c.l.b16 %v517
        %v530 = vunpack.c.l.b16 %v518
        %v531 = vunpack.c.l.b16 %v519
        %v532 = vpack.c.b16 %v529, %v528
        %v533 = vpack.c.b16 %v531, %v530
        %vm536 = vcmask 261120
        %v538 = vsel %vm536, %v515, 0
        %540 = vmatpush.bf16.msra.mxu0 0
        %541 = vmatpush.bf16.msra.mxu0 0
        %542 = vmatpush.bf16.msra.mxu0 0
        %543 = vmatpush.bf16.msra.mxu0 0
        %544 = vmatpush.bf16.msra.mxu0 0
        %545 = vmatpush.bf16.msra.mxu0 0
        %546 = vmatpush.bf16.msra.mxu0 %v533
        %547 = vmatpush.bf16.msra.mxu0 %v532
        %548 = vmatmul.bf16.gmra.mxu0 %v538
        %v549 = vpop.f32.mrf.mxu0
        %v550 = vadd.f32 %v522, %v549
        %v551 = vpop.f32.mrf.mxu0
        %552 = vdwg.mxu0
        %v553 = vpack.c.bf16 %v550, %v550
        %v554 = vld [vmem:[#allocation2] sm:$0xf]
        %v555 = vld [vmem:[#allocation3] sm:$0xf]
        %vm556 = vcmask 64512
        %v558 = vsel %vm556, %v553, 0
        %v561 = vsel %vm556, %v554, 0
        %563 = vmatpush.bf16.xpose.msra.mxu0 0
        %564 = vmatpush.bf16.xpose.msra.mxu0 0
        %565 = vmatpush.bf16.xpose.msra.mxu0 0
        %566 = vmatpush.bf16.xpose.msra.mxu0 0
        %567 = vmatpush.bf16.xpose.msra.mxu0 0
        %568 = vmatpush.bf16.xpose.msra.mxu0 0
        %569 = vmatpush.bf16.xpose.msra.mxu0 0
        %570 = vmatpush.bf16.xpose.msra.mxu0 %v561
        %571 = vmatmul.bf16.gmra.mxu0 %v558
        %v572 = vpop.f32.mrf.mxu0
        %v573 = vadd.f32 0.0, %v572
        %v574 = vpop.f32.mrf.mxu0
        %575 = vdwg.mxu0
        %v576 = vsel %vm556, %v573, -inf
        %577 = vmax.xlane.f32.xlu0 %v576
        %v578 = vpop.xlane.xlu0 %577
        %v579 = vsub.f32 %v573, %v578
        %v580 = vmul.f32 %v579, 1.442695
        %v581 = vpow.pop %v580
        %v582 = vsel %vm556, %v581, 0.0
        %583 = vadd.xlane.f32.xlu0 %v582
        %v584 = vpop.xlane.xlu0 %583
        %v585 = vpack.c.bf16 %v581, %v581
        %v587 = vsel %vm556, %v585, 0
        %vm589 = vcmask 1043456
        %v591 = vsel %vm589, %v555, 0
        %593 = vmatpush.bf16.msra.mxu0 0
        %594 = vmatpush.bf16.msra.mxu0 0
        %595 = vmatpush.bf16.msra.mxu0 0
        %596 = vmatpush.bf16.msra.mxu0 0
        %597 = vmatpush.bf16.msra.mxu0 0
        %598 = vmatpush.bf16.msra.mxu0 0
        %599 = vmatpush.bf16.msra.mxu0 0
        %600 = vmatpush.bf16.msra.mxu0 %v591
        %601 = vmatmul.bf16.gmra.mxu0 %v587
        %v602 = vpop.f32.mrf.mxu0
        %v603 = vadd.f32 0.0, %v602
        %v604 = vpop.f32.mrf.mxu0
        %605 = vdwg.mxu0
        %v606 = vrcp.pop %v584
        %v607 = vmul.f32 %v603, %v606
        %v608 = vpack.c.bf16 %v607, %v607
        %v609 = vld [vmem:[#allocation2] sm:$0xf]
        %v610 = vld [vmem:[#allocation3] sm:$0xf]
        %v612 = vunpack.c.l.b16 %v553
        %v613 = vpack.c.b16 %v612, %v612
        %614 = vrot.lane.b32.xlu0 %v613, 120
        %v615 = vpop.permute.xlu0 %614
        %v617 = vunpack.c.l.b16 %v609
        %v618 = vpack.c.b16 %v617, %v617
        %619 = vrot.lane.b32.xlu0 %v618, 120
        %v620 = vpop.permute.xlu0 %619
        %v622 = vsel %vm556, %v615, 0
        %v625 = vsel %vm556, %v620, 0
        %627 = vmatpush.bf16.xpose.msra.mxu0 0
        %628 = vmatpush.bf16.xpose.msra.mxu0 0
        %629 = vmatpush.bf16.xpose.msra.mxu0 0
        %630 = vmatpush.bf16.xpose.msra.mxu0 0
        %631 = vmatpush.bf16.xpose.msra.mxu0 0
        %632 = vmatpush.bf16.xpose.msra.mxu0 0
        %633 = vmatpush.bf16.xpose.msra.mxu0 0
        %634 = vmatpush.bf16.xpose.msra.mxu0 %v625
        %635 = vmatmul.bf16.gmra.mxu0 %v622
        %v636 = vpop.f32.mrf.mxu0
        %v637 = vadd.f32 0.0, %v636
        %v638 = vpop.f32.mrf.mxu0
        %639 = vdwg.mxu0
        %v640 = vsel %vm556, %v637, -inf
        %641 = vmax.xlane.f32.xlu0 %v640
        %v642 = vpop.xlane.xlu0 %641
        %v643 = vsub.f32 %v637, %v642
        %v644 = vmul.f32 %v643, 1.442695
        %v645 = vpow.pop %v644
        %v646 = vsel %vm556, %v645, 0.0
        %647 = vadd.xlane.f32.xlu0 %v646
        %v648 = vpop.xlane.xlu0 %647
        %v649 = vpack.c.bf16 %v645, %v645
        %v651 = vunpack.c.l.b16 %v610
        %v652 = vpack.c.b16 %v651, %v651
        %653 = vrot.lane.b32.xlu0 %v652, 120
        %v654 = vpop.permute.xlu0 %653
        %v656 = vsel %vm556, %v649, 0
        %v659 = vsel %vm589, %v654, 0
        %661 = vmatpush.bf16.msra.mxu0 0
        %662 = vmatpush.bf16.msra.mxu0 0
        %663 = vmatpush.bf16.msra.mxu0 0
        %664 = vmatpush.bf16.msra.mxu0 0
        %665 = vmatpush.bf16.msra.mxu0 0
        %666 = vmatpush.bf16.msra.mxu0 0
        %667 = vmatpush.bf16.msra.mxu0 0
        %668 = vmatpush.bf16.msra.mxu0 %v659
        %669 = vmatmul.bf16.gmra.mxu0 %v656
        %v670 = vpop.f32.mrf.mxu0
        %v671 = vadd.f32 0.0, %v670
        %v672 = vpop.f32.mrf.mxu0
        %673 = vdwg.mxu0
        %v674 = vrcp.pop %v648
        %v675 = vmul.f32 %v671, %v674
        %v676 = vpack.c.bf16 %v675, %v675
        %v677 = vld [vmem:[#allocation2] sm:$0xf]
        %v678 = vld [vmem:[#allocation3] sm:$0xf]
        %679 = vrot.lane.b32.xlu0 %v613, 112
        %v680 = vpop.permute.xlu0 %679
        %v682 = vunpack.c.l.b16 %v677
        %v683 = vpack.c.b16 %v682, %v682
        %684 = vrot.lane.b32.xlu0 %v683, 112
        %v685 = vpop.permute.xlu0 %684
        %v687 = vsel %vm556, %v680, 0
        %v690 = vsel %vm556, %v685, 0
        %692 = vmatpush.bf16.xpose.msra.mxu0 0
        %693 = vmatpush.bf16.xpose.msra.mxu0 0
        %694 = vmatpush.bf16.xpose.msra.mxu0 0
        %695 = vmatpush.bf16.xpose.msra.mxu0 0
        %696 = vmatpush.bf16.xpose.msra.mxu0 0
        %697 = vmatpush.bf16.xpose.msra.mxu0 0
        %698 = vmatpush.bf16.xpose.msra.mxu0 0
        %699 = vmatpush.bf16.xpose.msra.mxu0 %v690
        %700 = vmatmul.bf16.gmra.mxu0 %v687
        %v701 = vpop.f32.mrf.mxu0
        %v702 = vadd.f32 0.0, %v701
        %v703 = vpop.f32.mrf.mxu0
        %704 = vdwg.mxu0
        %v705 = vsel %vm556, %v702, -inf
        %706 = vmax.xlane.f32.xlu0 %v705
        %v707 = vpop.xlane.xlu0 %706
        %v708 = vsub.f32 %v702, %v707
        %v709 = vmul.f32 %v708, 1.442695
        %v710 = vpow.pop %v709
        %v711 = vsel %vm556, %v710, 0.0
        %712 = vadd.xlane.f32.xlu0 %v711
        %v713 = vpop.xlane.xlu0 %712
        %v714 = vpack.c.bf16 %v710, %v710
        %v716 = vunpack.c.l.b16 %v678
        %v717 = vpack.c.b16 %v716, %v716
        %718 = vrot.lane.b32.xlu0 %v717, 112
        %v719 = vpop.permute.xlu0 %718
        %v721 = vsel %vm556, %v714, 0
        %v724 = vsel %vm589, %v719, 0
        %726 = vmatpush.bf16.msra.mxu0 0
        %727 = vmatpush.bf16.msra.mxu0 0
        %728 = vmatpush.bf16.msra.mxu0 0
        %729 = vmatpush.bf16.msra.mxu0 0
        %730 = vmatpush.bf16.msra.mxu0 0
        %731 = vmatpush.bf16.msra.mxu0 0
        %732 = vmatpush.bf16.msra.mxu0 0
        %733 = vmatpush.bf16.msra.mxu0 %v724
        %734 = vmatmul.bf16.gmra.mxu0 %v721
        %v735 = vpop.f32.mrf.mxu0
        %v736 = vadd.f32 0.0, %v735
        %v737 = vpop.f32.mrf.mxu0
        %738 = vdwg.mxu0
        %v739 = vrcp.pop %v713
        %v740 = vmul.f32 %v736, %v739
        %v741 = vpack.c.bf16 %v740, %v740
        %v742 = vld [vmem:[#allocation2] sm:$0xf]
        %v743 = vld [vmem:[#allocation3] sm:$0xf]
        %744 = vrot.lane.b32.xlu0 %v613, 104
        %v745 = vpop.permute.xlu0 %744
        %v747 = vunpack.c.l.b16 %v742
        %v748 = vpack.c.b16 %v747, %v747
        %749 = vrot.lane.b32.xlu0 %v748, 104
        %v750 = vpop.permute.xlu0 %749
        %v752 = vsel %vm556, %v745, 0
        %v755 = vsel %vm556, %v750, 0
        %757 = vmatpush.bf16.xpose.msra.mxu0 0
        %758 = vmatpush.bf16.xpose.msra.mxu0 0
        %759 = vmatpush.bf16.xpose.msra.mxu0 0
        %760 = vmatpush.bf16.xpose.msra.mxu0 0
        %761 = vmatpush.bf16.xpose.msra.mxu0 0
        %762 = vmatpush.bf16.xpose.msra.mxu0 0
        %763 = vmatpush.bf16.xpose.msra.mxu0 0
        %764 = vmatpush.bf16.xpose.msra.mxu0 %v755
        %765 = vmatmul.bf16.gmra.mxu0 %v752
        %v766 = vpop.f32.mrf.mxu0
        %v767 = vadd.f32 0.0, %v766
        %v768 = vpop.f32.mrf.mxu0
        %769 = vdwg.mxu0
        %v770 = vsel %vm556, %v767, -inf
        %771 = vmax.xlane.f32.xlu0 %v770
        %v772 = vpop.xlane.xlu0 %771
        %v773 = vsub.f32 %v767, %v772
        %v774 = vmul.f32 %v773, 1.442695
        %v775 = vpow.pop %v774
        %v776 = vsel %vm556, %v775, 0.0
        %777 = vadd.xlane.f32.xlu0 %v776
        %v778 = vpop.xlane.xlu0 %777
        %v779 = vpack.c.bf16 %v775, %v775
        %v781 = vunpack.c.l.b16 %v743
        %v782 = vpack.c.b16 %v781, %v781
        %783 = vrot.lane.b32.xlu0 %v782, 104
        %v784 = vpop.permute.xlu0 %783
        %v786 = vsel %vm556, %v779, 0
        %v789 = vsel %vm589, %v784, 0
        %791 = vmatpush.bf16.msra.mxu0 0
        %792 = vmatpush.bf16.msra.mxu0 0
        %793 = vmatpush.bf16.msra.mxu0 0
        %794 = vmatpush.bf16.msra.mxu0 0
        %795 = vmatpush.bf16.msra.mxu0 0
        %796 = vmatpush.bf16.msra.mxu0 0
        %797 = vmatpush.bf16.msra.mxu0 0
        %798 = vmatpush.bf16.msra.mxu0 %v789
        %799 = vmatmul.bf16.gmra.mxu0 %v786
        %v800 = vpop.f32.mrf.mxu0
        %v801 = vadd.f32 0.0, %v800
        %v802 = vpop.f32.mrf.mxu0
        %803 = vdwg.mxu0
        %v804 = vrcp.pop %v778
        %v805 = vmul.f32 %v801, %v804
        %v806 = vpack.c.bf16 %v805, %v805
        %v808 = vunpack.c.l.b16 %v676
        %v809 = vpack.c.b16 %v808, %v808
        %810 = vrot.lane.b32.xlu0 %v809, 8
        %v811 = vpop.permute.xlu0 %810
        %v813 = vunpack.c.l.b16 %v741
        %v814 = vpack.c.b16 %v813, %v813
        %815 = vrot.lane.b32.xlu0 %v814, 16
        %v816 = vpop.permute.xlu0 %815
        %v818 = vunpack.c.l.b16 %v806
        %v819 = vpack.c.b16 %v818, %v818
        %820 = vrot.lane.b32.xlu0 %v819, 24
        %v821 = vpop.permute.xlu0 %820
        %v824 = vsel %vm556, %v608, %v811
        %vm825 = vcmask 130048
        %v827 = vsel %vm825, %v824, %v816
        %vm828 = vcmask 195584
        %v830 = vsel %vm828, %v827, %v821
        %v831 = vld [vmem:[#allocation12] sm:$0xf]
        %v832 = vld [vmem:[#allocation12 + $0x4] sm:$0xf]
        %v833 = vld [vmem:[#allocation12 + $0x8] sm:$0xf]
        %v834 = vld [vmem:[#allocation12 + $0xc] sm:$0xf]
        %v835 = vld [vmem:[%s8] sm:$0x1]
        %v837 = vperm.slane %v835, 0
        %v843 = vunpack.c.l.b16 %v831
        %v844 = vunpack.c.l.b16 %v832
        %v845 = vunpack.c.l.b16 %v833
        %v846 = vunpack.c.l.b16 %v834
        %v847 = vpack.c.b16 %v844, %v843
        %v848 = vpack.c.b16 %v846, %v845
        %v851 = vsel %vm536, %v830, 0
        %853 = vmatpush.bf16.msra.mxu0 0
        %854 = vmatpush.bf16.msra.mxu0 0
        %855 = vmatpush.bf16.msra.mxu0 0
        %856 = vmatpush.bf16.msra.mxu0 0
        %857 = vmatpush.bf16.msra.mxu0 0
        %858 = vmatpush.bf16.msra.mxu0 0
        %859 = vmatpush.bf16.msra.mxu0 %v848
        %860 = vmatpush.bf16.msra.mxu0 %v847
        %861 = vmatmul.bf16.gmra.mxu0 %v851
        %v862 = vpop.f32.mrf.mxu0
        %v863 = vadd.f32 %v837, %v862
        %v864 = vpop.f32.mrf.mxu0
        %865 = vdwg.mxu0
        %866 = vst.msk [vmem:[%s429] sm:$0xff] %vm536, %v863
        %s867 = sand.u32 %s244, 1
        %s868 = scalar_lea.sflag [#allocation6], %s867
        %s869 = sand.u32 %s244, 1
        %s870 = smul.addr %s869, 8
        %s871 = scalar_lea.vmem [#allocation13], %s870
        // Predicated region
        $region81: #{tpu_custom_call.1} parent=55 // pred_check
          %p872 = pneg %p254
        $region82: #{tpu_custom_call.1} parent=55 // pred_check_branch
          %874 = sbr.rel (%p872) target = $region84
        $region83: #{tpu_custom_call.1} parent=55 // pred_region
          %876 = vsyncadd %s868, 0
          %s877 = sadd.s32 %s33, %s32
          %s878 = smul.addr %s877, 8
          %s879 = scalar_lea.hbm %s9, %s878
          %s881 = sshll.u32 %s871, 4
          %s882 = int_to_ptr.vmem [resolvable:$true] %s881
          %s883 = sshll.u32 %s879, 4
          %s884 = int_to_ptr.hbm [resolvable:$true] %s883
          %886 = dma.vmem_to_hbm [thread:$0]  %s882, 128, %s884, %s868
        $region84: #{tpu_custom_call.1} parent=55 // pred_fallthru
          _
      $region56: #{tpu_custom_call.1} parent=5 // pred_fallthru
        _
      %p887 = scmp.le.s32.totalorder 2, %s23
      // Predicated region
      $region85: #{tpu_custom_call.1} parent=5 // pred_check
        %p888 = pneg %p887
      $region86: #{tpu_custom_call.1} parent=5 // pred_check_branch
        %890 = sbr.rel (%p888) target = $region88
      $region87: #{tpu_custom_call.1} parent=5 // pred_region
        %s891 = ssub.s32 %s23, 2
        // Predicated region
        $region89: #{tpu_custom_call.1} parent=87 // pred_check
          %p892 = pneg %p260
        $region90: #{tpu_custom_call.1} parent=87 // pred_check_branch
          %894 = sbr.rel (%p892) target = $region92
        $region91: #{tpu_custom_call.1} parent=87 // pred_region
          %s895 = sand.u32 %s245, 1
          %s896 = scalar_lea.sflag [#allocation6], %s895
          %s897 = sand.u32 %s245, 1
          %s898 = smul.addr %s897, 8
          %s899 = scalar_lea.vmem [#allocation13], %s898
          %901 = dma.done %s896, 128
        $region92: #{tpu_custom_call.1} parent=87 // pred_fallthru
          _
      $region88: #{tpu_custom_call.1} parent=5 // pred_fallthru
        _
    $region6: #{tpu_custom_call.1} parent=1 // loop_footer
      %s27 = sadd.s32 1, %s23
    $region7: #{tpu_custom_call.1} parent=1 // loop_footer_branch
      %22 = sbr.rel target = $region3
    $region8: #{tpu_custom_call.1} parent=1 // loop_exit
      _
    %902 = vsyncpa [#allocation5], 1
    %s903 = scalar_lea.sflag [#allocation5], 1
    %904 = vsyncpa %s903, 1
    %905 = vsyncpa [#allocation8], 1
    %906 = vsyncpa [#allocation11], 1
    %907 = vsyncpa [#allocation6], 1
    %s908 = scalar_lea.sflag [#allocation6], 1
    %909 = vsyncpa %s908, 1

// kernel: tpu_custom_call.1
$region0: #{tpu_custom_call.1}
  #allocation0 [shape = 'u32[]', space=smem, size = 0x4, offset = 0x4, fixed_abs, tag = 'smem constant byte address 0x4 - core index']
  #allocation1 [shape = 'u32[72,128]{1,0:T(1,128)}', space=vmem, size = 0x9000, scoped, tag = 'internal scratch']
  #allocation2 [shape = 'bf16[8,32]{1,0:T(8,128)(2,1)}', space=vmem, size = 0x800, scoped, tag = 'scratch operand']
  #allocation3 [shape = 'bf16[8,32]{1,0:T(8,128)(2,1)}', space=vmem, size = 0x800, scoped, tag = 'scratch operand']
  %s0 = inlined_call_operand.hbm [shape: f32[2,8,32], index: 0, kind: input, shape index: {}]
  %s1 = inlined_call_operand.hbm [shape: bf16[32,32], index: 1, kind: input, shape index: {}]
  %s2 = inlined_call_operand.vmem [shape: f32[1,32], index: 2, kind: input, shape index: {}]
  %s3 = inlined_call_operand.hbm [shape: bf16[32,32], index: 3, kind: input, shape index: {}]
  %s4 = inlined_call_operand.vmem [shape: f32[1,32], index: 4, kind: input, shape index: {}]
  %s5 = inlined_call_operand.hbm [shape: bf16[32,32], index: 5, kind: input, shape index: {}]
  %s6 = inlined_call_operand.vmem [shape: f32[1,32], index: 6, kind: input, shape index: {}]
  %s7 = inlined_call_operand.hbm [shape: bf16[32,32], index: 7, kind: input, shape index: {}]
  %s8 = inlined_call_operand.vmem [shape: f32[1,32], index: 8, kind: input, shape index: {}]
  %s9 = inlined_call_operand.hbm [shape: f32[2,8,32], index: 9, kind: output, shape index: {}]
  %s10 = sld [smem:[#allocation0]]
  $region93: #{tpu_custom_call.1} parent=0
    _
  %s12 = ssub.s32 1, %s10
  %s13 = scalar_select 0, %s12, %s10
  $region1: #{tpu_custom_call.1} parent=0
    #allocation4 [shape = 'u8[8192]{0}', space=vmem, size = 0x2000, scoped, tag = 'input window, operand 0']
    #allocation5 [shape = 's32[2]{0}', space=sflag, size = 0x8, scoped, tag = 'scoped memory for tpu_custom_call.1']
    #allocation6 [shape = 's32[2]{0}', space=sflag, size = 0x8, scoped, tag = 'scoped memory for tpu_custom_call.1']
    #allocation7 [shape = 'u8[8192]{0}', space=vmem, size = 0x2000, scoped, tag = 'input window, operand 1, single buffered']
    #allocation8 [shape = 's32[1]{0}', space=sflag, size = 0x4, scoped, tag = 'scoped memory for tpu_custom_call.1']
    #allocation9 [shape = 'u8[8192]{0}', space=vmem, size = 0x2000, scoped, tag = 'input window, operand 3, single buffered']
    #allocation10 [shape = 'u8[8192]{0}', space=vmem, size = 0x2000, scoped, tag = 'input window, operand 5, single buffered']
    #allocation11 [shape = 's32[1]{0}', space=sflag, size = 0x4, scoped, tag = 'scoped memory for tpu_custom_call.1']
    #allocation12 [shape = 'u8[8192]{0}', space=vmem, size = 0x2000, scoped, tag = 'input window, operand 7, single buffered']
    #allocation13 [shape = 'u8[8192]{0}', space=vmem, size = 0x2000, scoped, tag = 'output window, operand 0']
    %14 = vsyncpa [#allocation5], 0
    %s15 = scalar_lea.sflag [#allocation5], 1
    %16 = vsyncpa %s15, 0
    %17 = vsyncpa [#allocation8], 0
    %18 = vsyncpa [#allocation11], 0
    %19 = vsyncpa [#allocation6], 0
    %s20 = scalar_lea.sflag [#allocation6], 1
    %21 = vsyncpa %s20, 0
    loop: start=0, step=1, limit=4
    $region2: #{tpu_custom_call.1} parent=1 // loop_pre_header
      _
    $region3: #{tpu_custom_call.1} parent=1 // loop_header
      %s23 = sphi 0, %s27
      %p24 = scmp.ge.s32.totalorder %s23, 4
      %s30 = sphi 0, %s42
      %s31 = sphi 0, %s38
      %s32 = sphi 0, %s30
      %s33 = sphi 0, %s31
      %s34 = sphi 0, %s32
      %s35 = sphi 0, %s33
      %s45 = sphi 0, %s47
      %s48 = sphi 0, %s45
      %s49 = sphi 0, %s48
      %s65 = sphi 0, %s49
      %s69 = sphi 0, %s69
      %s71 = sphi 0, %s69
      %s72 = sphi 0, %s71
      %s86 = sphi 0, %s72
      %s90 = sphi 0, %s90
      %s92 = sphi 0, %s90
      %s93 = sphi 0, %s92
      %s107 = sphi 0, %s93
      %s111 = sphi 0, %s111
      %s113 = sphi 0, %s111
      %s114 = sphi 0, %s113
      %s128 = sphi 0, %s114
      %s132 = sphi 0, %s132
      %s134 = sphi 0, %s132
      %s135 = sphi 0, %s134
      %s149 = sphi 0, %s135
      %s153 = sphi 0, %s153
      %s155 = sphi 0, %s153
      %s156 = sphi 0, %s155
      %s170 = sphi 0, %s156
      %s174 = sphi 0, %s174
      %s176 = sphi 0, %s174
      %s177 = sphi 0, %s176
      %s191 = sphi 0, %s177
      %s195 = sphi 0, %s195
      %s197 = sphi 0, %s195
      %s198 = sphi 0, %s197
      %s212 = sphi 0, %s198
      %s216 = sphi 0, %s216
      %s218 = sphi 0, %s216
      %s219 = sphi 0, %s218
      %s233 = sphi 0, %s219
      %s241 = sphi 0, %s243
      %s244 = sphi 0, %s241
      %s245 = sphi 0, %s244
      %s261 = sphi 0, %s245
    $region4: #{tpu_custom_call.1} parent=1 // loop_header_branch
      %26 = sbr.rel (%p24) target = $region8
    $region5: #{tpu_custom_call.1} parent=1 // loop_body
      %s28 = ssub.s32 %s23, 1
      %s29 = ssub.s32 %s23, 2
      %s36 = sadd.s32 1, %s31
      %p37 = scmp.ge.s32.totalorder %s36, 1
      %s38 = scalar_select %p37, 0, %s36
      %s39 = sadd.s32 1, %s30
      %s40 = scalar_select %p37, %s39, %s30
      %p41 = scmp.ge.s32.totalorder %s40, 2
      %s42 = scalar_select %p41, 0, %s40
      %s43 = ssub.s32 %s30, %s42
      %p44 = scmp.eq.s32.totalorder %s43, 0
      %s46 = sadd.s32 %s45, 1
      %s47 = scalar_select %p44, %s45, %s46
      %p50 = pneg %p44
      %p51 = scmp.eq.s32.totalorder %s23, 1
      %p52 = por %p50, %p51
      %p53 = scmp.ne.s32.totalorder %s45, %s48
      %p54 = scmp.eq.s32.totalorder %s23, 0
      %p55 = por %p53, %p54
      %p56 = scmp.ne.s32.totalorder %s45, %s48
      %p57 = scmp.eq.s32.totalorder %s28, 1
      %p58 = por %p56, %p57
      %p59 = scmp.ne.s32.totalorder %s48, %s49
      %p60 = scmp.eq.s32.totalorder %s28, 0
      %p61 = por %p59, %p60
      %p62 = scmp.ne.s32.totalorder %s48, %s49
      %p63 = scmp.eq.s32.totalorder %s29, 1
      %p64 = por %p62, %p63
      %p66 = scmp.ne.s32.totalorder %s49, %s65
      %p67 = scmp.eq.s32.totalorder %s29, 0
      %p68 = por %p66, %p67
      %s70 = sadd.s32 %s69, 1
      %p73 = scmp.eq.s32.totalorder %s23, 1
      %p74 = scmp.ne.s32.totalorder %s69, %s71
      %p75 = scmp.eq.s32.totalorder %s23, 0
      %p76 = por %p74, %p75
      %p77 = scmp.ne.s32.totalorder %s69, %s71
      %p78 = scmp.eq.s32.totalorder %s28, 1
      %p79 = por %p77, %p78
      %p80 = scmp.ne.s32.totalorder %s71, %s72
      %p81 = scmp.eq.s32.totalorder %s28, 0
      %p82 = por %p80, %p81
      %p83 = scmp.ne.s32.totalorder %s71, %s72
      %p84 = scmp.eq.s32.totalorder %s29, 1
      %p85 = por %p83, %p84
      %p87 = scmp.ne.s32.totalorder %s72, %s86
      %p88 = scmp.eq.s32.totalorder %s29, 0
      %p89 = por %p87, %p88
      %s91 = sadd.s32 %s90, 1
      %p94 = scmp.eq.s32.totalorder %s23, 1
      %p95 = scmp.ne.s32.totalorder %s90, %s92
      %p96 = scmp.eq.s32.totalorder %s23, 0
      %p97 = por %p95, %p96
      %p98 = scmp.ne.s32.totalorder %s90, %s92
      %p99 = scmp.eq.s32.totalorder %s28, 1
      %p100 = por %p98, %p99
      %p101 = scmp.ne.s32.totalorder %s92, %s93
      %p102 = scmp.eq.s32.totalorder %s28, 0
      %p103 = por %p101, %p102
      %p104 = scmp.ne.s32.totalorder %s92, %s93
      %p105 = scmp.eq.s32.totalorder %s29, 1
      %p106 = por %p104, %p105
      %p108 = scmp.ne.s32.totalorder %s93, %s107
      %p109 = scmp.eq.s32.totalorder %s29, 0
      %p110 = por %p108, %p109
      %s112 = sadd.s32 %s111, 1
      %p115 = scmp.eq.s32.totalorder %s23, 1
      %p116 = scmp.ne.s32.totalorder %s111, %s113
      %p117 = scmp.eq.s32.totalorder %s23, 0
      %p118 = por %p116, %p117
      %p119 = scmp.ne.s32.totalorder %s111, %s113
      %p120 = scmp.eq.s32.totalorder %s28, 1
      %p121 = por %p119, %p120
      %p122 = scmp.ne.s32.totalorder %s113, %s114
      %p123 = scmp.eq.s32.totalorder %s28, 0
      %p124 = por %p122, %p123
      %p125 = scmp.ne.s32.totalorder %s113, %s114
      %p126 = scmp.eq.s32.totalorder %s29, 1
      %p127 = por %p125, %p126
      %p129 = scmp.ne.s32.totalorder %s114, %s128
      %p130 = scmp.eq.s32.totalorder %s29, 0
      %p131 = por %p129, %p130
      %s133 = sadd.s32 %s132, 1
      %p136 = scmp.eq.s32.totalorder %s23, 1
      %p137 = scmp.ne.s32.totalorder %s132, %s134
      %p138 = scmp.eq.s32.totalorder %s23, 0
      %p139 = por %p137, %p138
      %p140 = scmp.ne.s32.totalorder %s132, %s134
      %p141 = scmp.eq.s32.totalorder %s28, 1
      %p142 = por %p140, %p141
      %p143 = scmp.ne.s32.totalorder %s134, %s135
      %p144 = scmp.eq.s32.totalorder %s28, 0
      %p145 = por %p143, %p144
      %p146 = scmp.ne.s32.totalorder %s134, %s135
      %p147 = scmp.eq.s32.totalorder %s29, 1
      %p148 = por %p146, %p147
      %p150 = scmp.ne.s32.totalorder %s135, %s149
      %p151 = scmp.eq.s32.totalorder %s29, 0
      %p152 = por %p150, %p151
      %s154 = sadd.s32 %s153, 1
      %p157 = scmp.eq.s32.totalorder %s23, 1
      %p158 = scmp.ne.s32.totalorder %s153, %s155
      %p159 = scmp.eq.s32.totalorder %s23, 0
      %p160 = por %p158, %p159
      %p161 = scmp.ne.s32.totalorder %s153, %s155
      %p162 = scmp.eq.s32.totalorder %s28, 1
      %p163 = por %p161, %p162
      %p164 = scmp.ne.s32.totalorder %s155, %s156
      %p165 = scmp.eq.s32.totalorder %s28, 0
      %p166 = por %p164, %p165
      %p167 = scmp.ne.s32.totalorder %s155, %s156
      %p168 = scmp.eq.s32.totalorder %s29, 1
      %p169 = por %p167, %p168
      %p171 = scmp.ne.s32.totalorder %s156, %s170
      %p172 = scmp.eq.s32.totalorder %s29, 0
      %p173 = por %p171, %p172
      %s175 = sadd.s32 %s174, 1
      %p178 = scmp.eq.s32.totalorder %s23, 1
      %p179 = scmp.ne.s32.totalorder %s174, %s176
      %p180 = scmp.eq.s32.totalorder %s23, 0
      %p181 = por %p179, %p180
      %p182 = scmp.ne.s32.totalorder %s174, %s176
      %p183 = scmp.eq.s32.totalorder %s28, 1
      %p184 = por %p182, %p183
      %p185 = scmp.ne.s32.totalorder %s176, %s177
      %p186 = scmp.eq.s32.totalorder %s28, 0
      %p187 = por %p185, %p186
      %p188 = scmp.ne.s32.totalorder %s176, %s177
      %p189 = scmp.eq.s32.totalorder %s29, 1
      %p190 = por %p188, %p189
      %p192 = scmp.ne.s32.totalorder %s177, %s191
      %p193 = scmp.eq.s32.totalorder %s29, 0
      %p194 = por %p192, %p193
      %s196 = sadd.s32 %s195, 1
      %p199 = scmp.eq.s32.totalorder %s23, 1
      %p200 = scmp.ne.s32.totalorder %s195, %s197
      %p201 = scmp.eq.s32.totalorder %s23, 0
      %p202 = por %p200, %p201
      %p203 = scmp.ne.s32.totalorder %s195, %s197
      %p204 = scmp.eq.s32.totalorder %s28, 1
      %p205 = por %p203, %p204
      %p206 = scmp.ne.s32.totalorder %s197, %s198
      %p207 = scmp.eq.s32.totalorder %s28, 0
      %p208 = por %p206, %p207
      %p209 = scmp.ne.s32.totalorder %s197, %s198
      %p210 = scmp.eq.s32.totalorder %s29, 1
      %p211 = por %p209, %p210
      %p213 = scmp.ne.s32.totalorder %s198, %s212
      %p214 = scmp.eq.s32.totalorder %s29, 0
      %p215 = por %p213, %p214
      %s217 = sadd.s32 %s216, 1
      %p220 = scmp.eq.s32.totalorder %s23, 1
      %p221 = scmp.ne.s32.totalorder %s216, %s218
      %p222 = scmp.eq.s32.totalorder %s23, 0
      %p223 = por %p221, %p222
      %p224 = scmp.ne.s32.totalorder %s216, %s218
      %p225 = scmp.eq.s32.totalorder %s28, 1
      %p226 = por %p224, %p225
      %p227 = scmp.ne.s32.totalorder %s218, %s219
      %p228 = scmp.eq.s32.totalorder %s28, 0
      %p229 = por %p227, %p228
      %p230 = scmp.ne.s32.totalorder %s218, %s219
      %p231 = scmp.eq.s32.totalorder %s29, 1
      %p232 = por %p230, %p231
      %p234 = scmp.ne.s32.totalorder %s219, %s233
      %p235 = scmp.eq.s32.totalorder %s29, 0
      %p236 = por %p234, %p235
      %s237 = ssub.s32 %s30, %s42
      %s238 = ssub.s32 %s31, %s38
      %s239 = sor.u32 %s237, %s238
      %p240 = scmp.eq.s32.totalorder %s239, 0
      %s242 = sadd.s32 %s241, 1
      %s243 = scalar_select %p240, %s241, %s242
      %p246 = pneg %p240
      %p247 = scmp.eq.s32.totalorder %s23, 1
      %p248 = por %p246, %p247
      %p249 = scmp.ne.s32.totalorder %s241, %s244
      %p250 = scmp.eq.s32.totalorder %s23, 0
      %p251 = por %p249, %p250
      %p252 = scmp.ne.s32.totalorder %s241, %s244
      %p253 = scmp.eq.s32.totalorder %s28, 1
      %p254 = por %p252, %p253
      %p255 = scmp.ne.s32.totalorder %s244, %s245
      %p256 = scmp.eq.s32.totalorder %s28, 0
      %p257 = por %p255, %p256
      %p258 = scmp.ne.s32.totalorder %s244, %s245
      %p259 = scmp.eq.s32.totalorder %s29, 1
      %p260 = por %p258, %p259
      %p262 = scmp.ne.s32.totalorder %s245, %s261
      %p263 = scmp.eq.s32.totalorder %s29, 0
      %p264 = por %p262, %p263
      %p265 = scmp.le.s32.totalorder 1, %s23
      %p266 = scmp.lt.s32.totalorder %s23, 3
      %p267 = pnand %p265, %p266
      %p268 = pneg %p267
      // Predicated region
      $region9: #{tpu_custom_call.1} parent=5 // pred_check
        _
      $region10: #{tpu_custom_call.1} parent=5 // pred_check_branch
        %270 = sbr.rel (%p267) target = $region12
      $region11: #{tpu_custom_call.1} parent=5 // pred_region
        %s271 = ssub.s32 %s23, 1
        // Predicated region
        $region13: #{tpu_custom_call.1} parent=11 // pred_check
          %p272 = pneg %p82
        $region14: #{tpu_custom_call.1} parent=11 // pred_check_branch
          %274 = sbr.rel (%p272) target = $region16
        $region15: #{tpu_custom_call.1} parent=11 // pred_region
          %276 = vsyncadd [#allocation8], 0
          %s277 = sshll.u32 %s1, 4
          %s278 = int_to_ptr.hbm [resolvable:$true] %s277
          %s279 = sshll.u32 [#allocation7], 4
          %s280 = int_to_ptr.vmem [resolvable:$true] %s279
          %285 = dma.hbm_to_vmem [thread:$0]  %s278, 256, %s280, [#allocation8], 64, 64, 4
        $region16: #{tpu_custom_call.1} parent=11 // pred_fallthru
          _
        // Predicated region
        $region17: #{tpu_custom_call.1} parent=11 // pred_check
          %p286 = pneg %p103
        $region18: #{tpu_custom_call.1} parent=11 // pred_check_branch
          %288 = sbr.rel (%p286) target = $region20
        $region19: #{tpu_custom_call.1} parent=11 // pred_region
          _
        $region20: #{tpu_custom_call.1} parent=11 // pred_fallthru
          _
        // Predicated region
        $region21: #{tpu_custom_call.1} parent=11 // pred_check
          %p289 = pneg %p124
        $region22: #{tpu_custom_call.1} parent=11 // pred_check_branch
          %291 = sbr.rel (%p289) target = $region24
        $region23: #{tpu_custom_call.1} parent=11 // pred_region
          %293 = vsyncadd [#allocation8], 0
          %s294 = sshll.u32 %s3, 4
          %s295 = int_to_ptr.hbm [resolvable:$true] %s294
          %s296 = sshll.u32 [#allocation9], 4
          %s297 = int_to_ptr.vmem [resolvable:$true] %s296
          %302 = dma.hbm_to_vmem [thread:$0]  %s295, 256, %s297, [#allocation8], 64, 64, 4
        $region24: #{tpu_custom_call.1} parent=11 // pred_fallthru
          _
        // Predicated region
        $region25: #{tpu_custom_call.1} parent=11 // pred_check
          %p303 = pneg %p145
        $region26: #{tpu_custom_call.1} parent=11 // pred_check_branch
          %305 = sbr.rel (%p303) target = $region28
        $region27: #{tpu_custom_call.1} parent=11 // pred_region
          _
        $region28: #{tpu_custom_call.1} parent=11 // pred_fallthru
          _
        // Predicated region
        $region29: #{tpu_custom_call.1} parent=11 // pred_check
          %p306 = pneg %p166
        $region30: #{tpu_custom_call.1} parent=11 // pred_check_branch
          %308 = sbr.rel (%p306) target = $region32
        $region31: #{tpu_custom_call.1} parent=11 // pred_region
          %310 = vsyncadd [#allocation11], 0
          %s311 = sshll.u32 %s5, 4
          %s312 = int_to_ptr.hbm [resolvable:$true] %s311
          %s313 = sshll.u32 [#allocation10], 4
          %s314 = int_to_ptr.vmem [resolvable:$true] %s313
          %319 = dma.hbm_to_vmem [thread:$0]  %s312, 256, %s314, [#allocation11], 64, 64, 4
        $region32: #{tpu_custom_call.1} parent=11 // pred_fallthru
          _
        // Predicated region
        $region33: #{tpu_custom_call.1} parent=11 // pred_check
          %p320 = pneg %p187
        $region34: #{tpu_custom_call.1} parent=11 // pred_check_branch
          %322 = sbr.rel (%p320) target = $region36
        $region35: #{tpu_custom_call.1} parent=11 // pred_region
          _
        $region36: #{tpu_custom_call.1} parent=11 // pred_fallthru
          _
        // Predicated region
        $region37: #{tpu_custom_call.1} parent=11 // pred_check
          %p323 = pneg %p208
        $region38: #{tpu_custom_call.1} parent=11 // pred_check_branch
          %325 = sbr.rel (%p323) target = $region40
        $region39: #{tpu_custom_call.1} parent=11 // pred_region
          %327 = vsyncadd [#allocation11], 0
          %s328 = sshll.u32 %s7, 4
          %s329 = int_to_ptr.hbm [resolvable:$true] %s328
          %s330 = sshll.u32 [#allocation12], 4
          %s331 = int_to_ptr.vmem [resolvable:$true] %s330
          %336 = dma.hbm_to_vmem [thread:$0]  %s329, 256, %s331, [#allocation11], 64, 64, 4
        $region40: #{tpu_custom_call.1} parent=11 // pred_fallthru
          _
        // Predicated region
        $region41: #{tpu_custom_call.1} parent=11 // pred_check
          %p337 = pneg %p229
        $region42: #{tpu_custom_call.1} parent=11 // pred_check_branch
          %339 = sbr.rel (%p337) target = $region44
        $region43: #{tpu_custom_call.1} parent=11 // pred_region
          _
        $region44: #{tpu_custom_call.1} parent=11 // pred_fallthru
          _
      $region12: #{tpu_custom_call.1} parent=5 // pred_fallthru
        _
      %p340 = scmp.lt.s32.totalorder %s23, 2
      // Predicated region
      $region45: #{tpu_custom_call.1} parent=5 // pred_check
        %p341 = pneg %p340
      $region46: #{tpu_custom_call.1} parent=5 // pred_check_branch
        %343 = sbr.rel (%p341) target = $region48
      $region47: #{tpu_custom_call.1} parent=5 // pred_region
        // Predicated region
        $region49: #{tpu_custom_call.1} parent=47 // pred_check
          %p344 = pneg %p55
        $region50: #{tpu_custom_call.1} parent=47 // pred_check_branch
          %346 = sbr.rel (%p344) target = $region52
        $region51: #{tpu_custom_call.1} parent=47 // pred_region
          %s347 = sand.u32 %s45, 1
          %s348 = scalar_lea.sflag [#allocation5], %s347
          %s349 = sand.u32 %s45, 1
          %s350 = smul.addr %s349, 8
          %s351 = scalar_lea.vmem [#allocation4], %s350
          %353 = vsyncadd %s348, 0
          %s354 = smul.addr %s30, 8
          %s355 = scalar_lea.hbm %s0, %s354
          %s357 = sshll.u32 %s355, 4
          %s358 = int_to_ptr.hbm [resolvable:$true] %s357
          %s359 = sshll.u32 %s351, 4
          %s360 = int_to_ptr.vmem [resolvable:$true] %s359
          %362 = dma.hbm_to_vmem [thread:$0]  %s358, 128, %s360, %s348
        $region52: #{tpu_custom_call.1} parent=47 // pred_fallthru
          _
      $region48: #{tpu_custom_call.1} parent=5 // pred_fallthru
        _
      %p363 = scmp.le.s32.totalorder 1, %s23
      %p364 = scmp.lt.s32.totalorder %s23, 3
      %p365 = pnand %p363, %p364
      %p366 = pneg %p365
      // Predicated region
      $region53: #{tpu_custom_call.1} parent=5 // pred_check
        _
      $region54: #{tpu_custom_call.1} parent=5 // pred_check_branch
        %368 = sbr.rel (%p365) target = $region56
      $region55: #{tpu_custom_call.1} parent=5 // pred_region
        %s369 = ssub.s32 %s23, 1
        %s370 = sand.u32 %s48, 1
        %s371 = scalar_lea.sflag [#allocation5], %s370
        %s372 = sand.u32 %s48, 1
        %s373 = smul.addr %s372, 8
        %s374 = scalar_lea.vmem [#allocation4], %s373
        // Predicated region
        $region57: #{tpu_custom_call.1} parent=55 // pred_check
          %p375 = pneg %p61
        $region58: #{tpu_custom_call.1} parent=55 // pred_check_branch
          %377 = sbr.rel (%p375) target = $region60
        $region59: #{tpu_custom_call.1} parent=55 // pred_region
          %379 = dma.done %s371, 128
        $region60: #{tpu_custom_call.1} parent=55 // pred_fallthru
          _
        // Predicated region
        $region61: #{tpu_custom_call.1} parent=55 // pred_check
          %p380 = pneg %p82
        $region62: #{tpu_custom_call.1} parent=55 // pred_check_branch
          %382 = sbr.rel (%p380) target = $region64
        $region63: #{tpu_custom_call.1} parent=55 // pred_region
          %384 = dma.done [#allocation8], 256
        $region64: #{tpu_custom_call.1} parent=55 // pred_fallthru
          _
        // Predicated region
        $region65: #{tpu_custom_call.1} parent=55 // pred_check
          %p385 = pneg %p124
        $region66: #{tpu_custom_call.1} parent=55 // pred_check_branch
          %387 = sbr.rel (%p385) target = $region68
        $region67: #{tpu_custom_call.1} parent=55 // pred_region
          %389 = dma.done [#allocation8], 256
        $region68: #{tpu_custom_call.1} parent=55 // pred_fallthru
          _
        // Predicated region
        $region69: #{tpu_custom_call.1} parent=55 // pred_check
          %p390 = pneg %p166
        $region70: #{tpu_custom_call.1} parent=55 // pred_check_branch
          %392 = sbr.rel (%p390) target = $region72
        $region71: #{tpu_custom_call.1} parent=55 // pred_region
          %394 = dma.done [#allocation11], 256
        $region72: #{tpu_custom_call.1} parent=55 // pred_fallthru
          _
        // Predicated region
        $region73: #{tpu_custom_call.1} parent=55 // pred_check
          %p395 = pneg %p208
        $region74: #{tpu_custom_call.1} parent=55 // pred_check_branch
          %397 = sbr.rel (%p395) target = $region76
        $region75: #{tpu_custom_call.1} parent=55 // pred_region
          %399 = dma.done [#allocation11], 256
        $region76: #{tpu_custom_call.1} parent=55 // pred_fallthru
          _
        %s400 = sand.u32 %s48, 1
        %s401 = scalar_lea.sflag [#allocation5], %s400
        %s402 = sand.u32 %s48, 1
        %s403 = smul.addr %s402, 8
        %s404 = scalar_lea.vmem [#allocation4], %s403
        %p405 = pneg %p61
        %p406 = pneg %p58
        %p407 = pneg %p82
        %p408 = pneg %p79
        %p409 = pneg %p103
        %p410 = pneg %p100
        %p411 = pneg %p124
        %p412 = pneg %p121
        %p413 = pneg %p145
        %p414 = pneg %p142
        %p415 = pneg %p166
        %p416 = pneg %p163
        %p417 = pneg %p187
        %p418 = pneg %p184
        %p419 = pneg %p208
        %p420 = pneg %p205
        %p421 = pneg %p229
        %p422 = pneg %p226
        %p423 = pneg %p257
        %p424 = pneg %p254
        %s425 = sand.u32 %s244, 1
        %s426 = scalar_lea.sflag [#allocation6], %s425
        %s427 = sand.u32 %s244, 1
        %s428 = smul.addr %s427, 8
        %s429 = scalar_lea.vmem [#allocation13], %s428
        %p431 = scmp.eq.s32.totalorder %s33, 0
        // Predicated region
        $region77: #{tpu_custom_call.1} parent=55 // pred_check
          %p432 = pneg %p431
        $region78: #{tpu_custom_call.1} parent=55 // pred_check_branch
          %434 = sbr.rel (%p432) target = $region80
        $region79: #{tpu_custom_call.1} parent=55 // pred_region
          %v435 = vld [vmem:[%s374] sm:$0xff]
          %v436 = vpack.c.bf16 %v435, %v435
          %v437 = vld [vmem:[#allocation9] sm:$0xf]
          %v438 = vld [vmem:[#allocation9 + $0x4] sm:$0xf]
          %v439 = vld [vmem:[#allocation9 + $0x8] sm:$0xf]
          %v440 = vld [vmem:[#allocation9 + $0xc] sm:$0xf]
          %v441 = vld [vmem:[%s4] sm:$0x1]
          %v443 = vperm.slane %v441, 0
          %v449 = vunpack.c.l.b16 %v437
          %v450 = vunpack.c.l.b16 %v438
          %v451 = vunpack.c.l.b16 %v439
          %v452 = vunpack.c.l.b16 %v440
          %v453 = vpack.c.b16 %v450, %v449
          %v454 = vpack.c.b16 %v452, %v451
          %vm457 = vcmask 261120
          %v459 = vsel %vm457, %v436, 0
          %461 = vmatpush.bf16.msra.mxu0 0
          %462 = vmatpush.bf16.msra.mxu0 0
          %463 = vmatpush.bf16.msra.mxu0 0
          %464 = vmatpush.bf16.msra.mxu0 0
          %465 = vmatpush.bf16.msra.mxu0 0
          %466 = vmatpush.bf16.msra.mxu0 0
          %467 = vmatpush.bf16.msra.mxu0 %v454
          %468 = vmatpush.bf16.msra.mxu0 %v453
          %469 = vmatmul.bf16.gmra.mxu0 %v459
          %v470 = vpop.f32.mrf.mxu0
          %v471 = vadd.f32 %v443, %v470
          %v472 = vpop.f32.mrf.mxu0
          %473 = vdwg.mxu0
          %v474 = vpack.c.bf16 %v471, %v471
          %vm475 = vcmask 257024
          %476 = vst.msk [vmem:[#allocation2] sm:$0xf] %vm475, %v474
          %v477 = vld [vmem:[#allocation10] sm:$0xf]
          %v478 = vld [vmem:[#allocation10 + $0x4] sm:$0xf]
          %v479 = vld [vmem:[#allocation10 + $0x8] sm:$0xf]
          %v480 = vld [vmem:[#allocation10 + $0xc] sm:$0xf]
          %v481 = vld [vmem:[%s6] sm:$0x1]
          %v483 = vperm.slane %v481, 0
          %v489 = vunpack.c.l.b16 %v477
          %v490 = vunpack.c.l.b16 %v478
          %v491 = vunpack.c.l.b16 %v479
          %v492 = vunpack.c.l.b16 %v480
          %v493 = vpack.c.b16 %v490, %v489
          %v494 = vpack.c.b16 %v492, %v491
          %497 = vmatpush.bf16.msra.mxu0 0
          %498 = vmatpush.bf16.msra.mxu0 0
          %499 = vmatpush.bf16.msra.mxu0 0
          %500 = vmatpush.bf16.msra.mxu0 0
          %501 = vmatpush.bf16.msra.mxu0 0
          %502 = vmatpush.bf16.msra.mxu0 0
          %503 = vmatpush.bf16.msra.mxu0 %v494
          %504 = vmatpush.bf16.msra.mxu0 %v493
          %505 = vmatmul.bf16.gmra.mxu0 %v459
          %v506 = vpop.f32.mrf.mxu0
          %v507 = vadd.f32 %v483, %v506
          %v508 = vpop.f32.mrf.mxu0
          %509 = vdwg.mxu0
          %v510 = vpack.c.bf16 %v507, %v507
          %511 = vst.msk [vmem:[#allocation3] sm:$0xf] %vm475, %v510
        $region80: #{tpu_custom_call.1} parent=55 // pred_fallthru
          _
        %s512 = smul.u32 %s33, 8
        %s513 = scalar_lea.vmem %s374, %s512 [#allocation4]
        %v514 = vld [vmem:[%s513] sm:$0xff]
        %v515 = vpack.c.bf16 %v514, %v514
        %v516 = vld [vmem:[#allocation7] sm:$0xf]
        %v517 = vld [vmem:[#allocation7 + $0x4] sm:$0xf]
        %v518 = vld [vmem:[#allocation7 + $0x8] sm:$0xf]
        %v519 = vld [vmem:[#allocation7 + $0xc] sm:$0xf]
        %v520 = vld [vmem:[%s2] sm:$0x1]
        %v522 = vperm.slane %v520, 0
        %v528 = vunpack.c.l.b16 %v516
        %v529 = vunpack.c.l.b16 %v517
        %v530 = vunpack.c.l.b16 %v518
        %v531 = vunpack.c.l.b16 %v519
        %v532 = vpack.c.b16 %v529, %v528
        %v533 = vpack.c.b16 %v531, %v530
        %vm536 = vcmask 261120
        %v538 = vsel %vm536, %v515, 0
        %540 = vmatpush.bf16.msra.mxu0 0
        %541 = vmatpush.bf16.msra.mxu0 0
        %542 = vmatpush.bf16.msra.mxu0 0
        %543 = vmatpush.bf16.msra.mxu0 0
        %544 = vmatpush.bf16.msra.mxu0 0
        %545 = vmatpush.bf16.msra.mxu0 0
        %546 = vmatpush.bf16.msra.mxu0 %v533
        %547 = vmatpush.bf16.msra.mxu0 %v532
        %548 = vmatmul.bf16.gmra.mxu0 %v538
        %v549 = vpop.f32.mrf.mxu0
        %v550 = vadd.f32 %v522, %v549
        %v551 = vpop.f32.mrf.mxu0
        %552 = vdwg.mxu0
        %v553 = vpack.c.bf16 %v550, %v550
        %v554 = vld [vmem:[#allocation2] sm:$0xf]
        %v555 = vld [vmem:[#allocation3] sm:$0xf]
        %vm556 = vcmask 64512
        %v558 = vsel %vm556, %v553, 0
        %v561 = vsel %vm556, %v554, 0
        %563 = vmatpush.bf16.xpose.msra.mxu0 0
        %564 = vmatpush.bf16.xpose.msra.mxu0 0
        %565 = vmatpush.bf16.xpose.msra.mxu0 0
        %566 = vmatpush.bf16.xpose.msra.mxu0 0
        %567 = vmatpush.bf16.xpose.msra.mxu0 0
        %568 = vmatpush.bf16.xpose.msra.mxu0 0
        %569 = vmatpush.bf16.xpose.msra.mxu0 0
        %570 = vmatpush.bf16.xpose.msra.mxu0 %v561
        %571 = vmatmul.bf16.gmra.mxu0 %v558
        %v572 = vpop.f32.mrf.mxu0
        %v573 = vadd.f32 0.0, %v572
        %v574 = vpop.f32.mrf.mxu0
        %575 = vdwg.mxu0
        %v576 = vsel %vm556, %v573, -inf
        %577 = vmax.xlane.f32.xlu0 %v576
        %v578 = vpop.xlane.xlu0 %577
        %v579 = vsub.f32 %v573, %v578
        %v580 = vmul.f32 %v579, 1.442695
        %v581 = vpow.pop %v580
        %v582 = vsel %vm556, %v581, 0.0
        %583 = vadd.xlane.f32.xlu0 %v582
        %v584 = vpop.xlane.xlu0 %583
        %v585 = vpack.c.bf16 %v581, %v581
        %v587 = vsel %vm556, %v585, 0
        %vm589 = vcmask 1043456
        %v591 = vsel %vm589, %v555, 0
        %593 = vmatpush.bf16.msra.mxu0 0
        %594 = vmatpush.bf16.msra.mxu0 0
        %595 = vmatpush.bf16.msra.mxu0 0
        %596 = vmatpush.bf16.msra.mxu0 0
        %597 = vmatpush.bf16.msra.mxu0 0
        %598 = vmatpush.bf16.msra.mxu0 0
        %599 = vmatpush.bf16.msra.mxu0 0
        %600 = vmatpush.bf16.msra.mxu0 %v591
        %601 = vmatmul.bf16.gmra.mxu0 %v587
        %v602 = vpop.f32.mrf.mxu0
        %v603 = vadd.f32 0.0, %v602
        %v604 = vpop.f32.mrf.mxu0
        %605 = vdwg.mxu0
        %v606 = vrcp.pop %v584
        %v607 = vmul.f32 %v603, %v606
        %v608 = vpack.c.bf16 %v607, %v607
        %v609 = vld [vmem:[#allocation2] sm:$0xf]
        %v610 = vld [vmem:[#allocation3] sm:$0xf]
        %v612 = vunpack.c.l.b16 %v553
        %v613 = vpack.c.b16 %v612, %v612
        %614 = vrot.lane.b32.xlu0 %v613, 120
        %v615 = vpop.permute.xlu0 %614
        %v617 = vunpack.c.l.b16 %v609
        %v618 = vpack.c.b16 %v617, %v617
        %619 = vrot.lane.b32.xlu0 %v618, 120
        %v620 = vpop.permute.xlu0 %619
        %v622 = vsel %vm556, %v615, 0
        %v625 = vsel %vm556, %v620, 0
        %627 = vmatpush.bf16.xpose.msra.mxu0 0
        %628 = vmatpush.bf16.xpose.msra.mxu0 0
        %629 = vmatpush.bf16.xpose.msra.mxu0 0
        %630 = vmatpush.bf16.xpose.msra.mxu0 0
        %631 = vmatpush.bf16.xpose.msra.mxu0 0
        %632 = vmatpush.bf16.xpose.msra.mxu0 0
        %633 = vmatpush.bf16.xpose.msra.mxu0 0
        %634 = vmatpush.bf16.xpose.msra.mxu0 %v625
        %635 = vmatmul.bf16.gmra.mxu0 %v622
        %v636 = vpop.f32.mrf.mxu0
        %v637 = vadd.f32 0.0, %v636
        %v638 = vpop.f32.mrf.mxu0
        %639 = vdwg.mxu0
        %v640 = vsel %vm556, %v637, -inf
        %641 = vmax.xlane.f32.xlu0 %v640
        %v642 = vpop.xlane.xlu0 %641
        %v643 = vsub.f32 %v637, %v642
        %v644 = vmul.f32 %v643, 1.442695
        %v645 = vpow.pop %v644
        %v646 = vsel %vm556, %v645, 0.0
        %647 = vadd.xlane.f32.xlu0 %v646
        %v648 = vpop.xlane.xlu0 %647
        %v649 = vpack.c.bf16 %v645, %v645
        %v651 = vunpack.c.l.b16 %v610
        %v652 = vpack.c.b16 %v651, %v651
        %653 = vrot.lane.b32.xlu0 %v652, 120
        %v654 = vpop.permute.xlu0 %653
        %v656 = vsel %vm556, %v649, 0
        %v659 = vsel %vm589, %v654, 0
        %661 = vmatpush.bf16.msra.mxu0 0
        %662 = vmatpush.bf16.msra.mxu0 0
        %663 = vmatpush.bf16.msra.mxu0 0
        %664 = vmatpush.bf16.msra.mxu0 0
        %665 = vmatpush.bf16.msra.mxu0 0
        %666 = vmatpush.bf16.msra.mxu0 0
        %667 = vmatpush.bf16.msra.mxu0 0
        %668 = vmatpush.bf16.msra.mxu0 %v659
        %669 = vmatmul.bf16.gmra.mxu0 %v656
        %v670 = vpop.f32.mrf.mxu0
        %v671 = vadd.f32 0.0, %v670
        %v672 = vpop.f32.mrf.mxu0
        %673 = vdwg.mxu0
        %v674 = vrcp.pop %v648
        %v675 = vmul.f32 %v671, %v674
        %v676 = vpack.c.bf16 %v675, %v675
        %v677 = vld [vmem:[#allocation2] sm:$0xf]
        %v678 = vld [vmem:[#allocation3] sm:$0xf]
        %679 = vrot.lane.b32.xlu0 %v613, 112
        %v680 = vpop.permute.xlu0 %679
        %v682 = vunpack.c.l.b16 %v677
        %v683 = vpack.c.b16 %v682, %v682
        %684 = vrot.lane.b32.xlu0 %v683, 112
        %v685 = vpop.permute.xlu0 %684
        %v687 = vsel %vm556, %v680, 0
        %v690 = vsel %vm556, %v685, 0
        %692 = vmatpush.bf16.xpose.msra.mxu0 0
        %693 = vmatpush.bf16.xpose.msra.mxu0 0
        %694 = vmatpush.bf16.xpose.msra.mxu0 0
        %695 = vmatpush.bf16.xpose.msra.mxu0 0
        %696 = vmatpush.bf16.xpose.msra.mxu0 0
        %697 = vmatpush.bf16.xpose.msra.mxu0 0
        %698 = vmatpush.bf16.xpose.msra.mxu0 0
        %699 = vmatpush.bf16.xpose.msra.mxu0 %v690
        %700 = vmatmul.bf16.gmra.mxu0 %v687
        %v701 = vpop.f32.mrf.mxu0
        %v702 = vadd.f32 0.0, %v701
        %v703 = vpop.f32.mrf.mxu0
        %704 = vdwg.mxu0
        %v705 = vsel %vm556, %v702, -inf
        %706 = vmax.xlane.f32.xlu0 %v705
        %v707 = vpop.xlane.xlu0 %706
        %v708 = vsub.f32 %v702, %v707
        %v709 = vmul.f32 %v708, 1.442695
        %v710 = vpow.pop %v709
        %v711 = vsel %vm556, %v710, 0.0
        %712 = vadd.xlane.f32.xlu0 %v711
        %v713 = vpop.xlane.xlu0 %712
        %v714 = vpack.c.bf16 %v710, %v710
        %v716 = vunpack.c.l.b16 %v678
        %v717 = vpack.c.b16 %v716, %v716
        %718 = vrot.lane.b32.xlu0 %v717, 112
        %v719 = vpop.permute.xlu0 %718
        %v721 = vsel %vm556, %v714, 0
        %v724 = vsel %vm589, %v719, 0
        %726 = vmatpush.bf16.msra.mxu0 0
        %727 = vmatpush.bf16.msra.mxu0 0
        %728 = vmatpush.bf16.msra.mxu0 0
        %729 = vmatpush.bf16.msra.mxu0 0
        %730 = vmatpush.bf16.msra.mxu0 0
        %731 = vmatpush.bf16.msra.mxu0 0
        %732 = vmatpush.bf16.msra.mxu0 0
        %733 = vmatpush.bf16.msra.mxu0 %v724
        %734 = vmatmul.bf16.gmra.mxu0 %v721
        %v735 = vpop.f32.mrf.mxu0
        %v736 = vadd.f32 0.0, %v735
        %v737 = vpop.f32.mrf.mxu0
        %738 = vdwg.mxu0
        %v739 = vrcp.pop %v713
        %v740 = vmul.f32 %v736, %v739
        %v741 = vpack.c.bf16 %v740, %v740
        %v742 = vld [vmem:[#allocation2] sm:$0xf]
        %v743 = vld [vmem:[#allocation3] sm:$0xf]
        %744 = vrot.lane.b32.xlu0 %v613, 104
        %v745 = vpop.permute.xlu0 %744
        %v747 = vunpack.c.l.b16 %v742
        %v748 = vpack.c.b16 %v747, %v747
        %749 = vrot.lane.b32.xlu0 %v748, 104
        %v750 = vpop.permute.xlu0 %749
        %v752 = vsel %vm556, %v745, 0
        %v755 = vsel %vm556, %v750, 0
        %757 = vmatpush.bf16.xpose.msra.mxu0 0
        %758 = vmatpush.bf16.xpose.msra.mxu0 0
        %759 = vmatpush.bf16.xpose.msra.mxu0 0
        %760 = vmatpush.bf16.xpose.msra.mxu0 0
        %761 = vmatpush.bf16.xpose.msra.mxu0 0
        %762 = vmatpush.bf16.xpose.msra.mxu0 0
        %763 = vmatpush.bf16.xpose.msra.mxu0 0
        %764 = vmatpush.bf16.xpose.msra.mxu0 %v755
        %765 = vmatmul.bf16.gmra.mxu0 %v752
        %v766 = vpop.f32.mrf.mxu0
        %v767 = vadd.f32 0.0, %v766
        %v768 = vpop.f32.mrf.mxu0
        %769 = vdwg.mxu0
        %v770 = vsel %vm556, %v767, -inf
        %771 = vmax.xlane.f32.xlu0 %v770
        %v772 = vpop.xlane.xlu0 %771
        %v773 = vsub.f32 %v767, %v772
        %v774 = vmul.f32 %v773, 1.442695
        %v775 = vpow.pop %v774
        %v776 = vsel %vm556, %v775, 0.0
        %777 = vadd.xlane.f32.xlu0 %v776
        %v778 = vpop.xlane.xlu0 %777
        %v779 = vpack.c.bf16 %v775, %v775
        %v781 = vunpack.c.l.b16 %v743
        %v782 = vpack.c.b16 %v781, %v781
        %783 = vrot.lane.b32.xlu0 %v782, 104
        %v784 = vpop.permute.xlu0 %783
        %v786 = vsel %vm556, %v779, 0
        %v789 = vsel %vm589, %v784, 0
        %791 = vmatpush.bf16.msra.mxu0 0
        %792 = vmatpush.bf16.msra.mxu0 0
        %793 = vmatpush.bf16.msra.mxu0 0
        %794 = vmatpush.bf16.msra.mxu0 0
        %795 = vmatpush.bf16.msra.mxu0 0
        %796 = vmatpush.bf16.msra.mxu0 0
        %797 = vmatpush.bf16.msra.mxu0 0
        %798 = vmatpush.bf16.msra.mxu0 %v789
        %799 = vmatmul.bf16.gmra.mxu0 %v786
        %v800 = vpop.f32.mrf.mxu0
        %v801 = vadd.f32 0.0, %v800
        %v802 = vpop.f32.mrf.mxu0
        %803 = vdwg.mxu0
        %v804 = vrcp.pop %v778
        %v805 = vmul.f32 %v801, %v804
        %v806 = vpack.c.bf16 %v805, %v805
        %v808 = vunpack.c.l.b16 %v676
        %v809 = vpack.c.b16 %v808, %v808
        %810 = vrot.lane.b32.xlu0 %v809, 8
        %v811 = vpop.permute.xlu0 %810
        %v813 = vunpack.c.l.b16 %v741
        %v814 = vpack.c.b16 %v813, %v813
        %815 = vrot.lane.b32.xlu0 %v814, 16
        %v816 = vpop.permute.xlu0 %815
        %v818 = vunpack.c.l.b16 %v806
        %v819 = vpack.c.b16 %v818, %v818
        %820 = vrot.lane.b32.xlu0 %v819, 24
        %v821 = vpop.permute.xlu0 %820
        %v824 = vsel %vm556, %v608, %v811
        %vm825 = vcmask 130048
        %v827 = vsel %vm825, %v824, %v816
        %vm828 = vcmask 195584
        %v830 = vsel %vm828, %v827, %v821
        %v831 = vld [vmem:[#allocation12] sm:$0xf]
        %v832 = vld [vmem:[#allocation12 + $0x4] sm:$0xf]
        %v833 = vld [vmem:[#allocation12 + $0x8] sm:$0xf]
        %v834 = vld [vmem:[#allocation12 + $0xc] sm:$0xf]
        %v835 = vld [vmem:[%s8] sm:$0x1]
        %v837 = vperm.slane %v835, 0
        %v843 = vunpack.c.l.b16 %v831
        %v844 = vunpack.c.l.b16 %v832
        %v845 = vunpack.c.l.b16 %v833
        %v846 = vunpack.c.l.b16 %v834
        %v847 = vpack.c.b16 %v844, %v843
        %v848 = vpack.c.b16 %v846, %v845
        %v851 = vsel %vm536, %v830, 0
        %853 = vmatpush.bf16.msra.mxu0 0
        %854 = vmatpush.bf16.msra.mxu0 0
        %855 = vmatpush.bf16.msra.mxu0 0
        %856 = vmatpush.bf16.msra.mxu0 0
        %857 = vmatpush.bf16.msra.mxu0 0
        %858 = vmatpush.bf16.msra.mxu0 0
        %859 = vmatpush.bf16.msra.mxu0 %v848
        %860 = vmatpush.bf16.msra.mxu0 %v847
        %861 = vmatmul.bf16.gmra.mxu0 %v851
        %v862 = vpop.f32.mrf.mxu0
        %v863 = vadd.f32 %v837, %v862
        %v864 = vpop.f32.mrf.mxu0
        %865 = vdwg.mxu0
        %866 = vst.msk [vmem:[%s429] sm:$0xff] %vm536, %v863
        %s867 = sand.u32 %s244, 1
        %s868 = scalar_lea.sflag [#allocation6], %s867
        %s869 = sand.u32 %s244, 1
        %s870 = smul.addr %s869, 8
        %s871 = scalar_lea.vmem [#allocation13], %s870
        // Predicated region
        $region81: #{tpu_custom_call.1} parent=55 // pred_check
          %p872 = pneg %p254
        $region82: #{tpu_custom_call.1} parent=55 // pred_check_branch
          %874 = sbr.rel (%p872) target = $region84
        $region83: #{tpu_custom_call.1} parent=55 // pred_region
          %876 = vsyncadd %s868, 0
          %s877 = sadd.s32 %s33, %s32
          %s878 = smul.addr %s877, 8
          %s879 = scalar_lea.hbm %s9, %s878
          %s881 = sshll.u32 %s871, 4
          %s882 = int_to_ptr.vmem [resolvable:$true] %s881
          %s883 = sshll.u32 %s879, 4
          %s884 = int_to_ptr.hbm [resolvable:$true] %s883
          %886 = dma.vmem_to_hbm [thread:$0]  %s882, 128, %s884, %s868
        $region84: #{tpu_custom_call.1} parent=55 // pred_fallthru
          _
      $region56: #{tpu_custom_call.1} parent=5 // pred_fallthru
        _
      %p887 = scmp.le.s32.totalorder 2, %s23
      // Predicated region
      $region85: #{tpu_custom_call.1} parent=5 // pred_check
        %p888 = pneg %p887
      $region86: #{tpu_custom_call.1} parent=5 // pred_check_branch
        %890 = sbr.rel (%p888) target = $region88
      $region87: #{tpu_custom_call.1} parent=5 // pred_region
        %s891 = ssub.s32 %s23, 2
        // Predicated region
        $region89: #{tpu_custom_call.1} parent=87 // pred_check
          %p892 = pneg %p260
        $region90: #{tpu_custom_call.1} parent=87 // pred_check_branch
          %894 = sbr.rel (%p892) target = $region92
        $region91: #{tpu_custom_call.1} parent=87 // pred_region
          %s895 = sand.u32 %s245, 1
          %s896 = scalar_lea.sflag [#allocation6], %s895
          %s897 = sand.u32 %s245, 1
          %s898 = smul.addr %s897, 8
          %s899 = scalar_lea.vmem [#allocation13], %s898
          %901 = dma.done %s896, 128
        $region92: #{tpu_custom_call.1} parent=87 // pred_fallthru
          _
      $region88: #{tpu_custom_call.1} parent=5 // pred_fallthru
        _
    $region6: #{tpu_custom_call.1} parent=1 // loop_footer
      %s27 = sadd.s32 1, %s23
    $region7: #{tpu_custom_call.1} parent=1 // loop_footer_branch
      %22 = sbr.rel target = $region3
    $region8: #{tpu_custom_call.1} parent=1 // loop_exit
      _
    %902 = vsyncpa [#allocation5], 1
    %s903 = scalar_lea.sflag [#allocation5], 1
    %904 = vsyncpa %s903, 1
    %905 = vsyncpa [#allocation8], 1
    %906 = vsyncpa [#allocation11], 1
    %907 = vsyncpa [#allocation6], 1
    %s908 = scalar_lea.sflag [#allocation6], 1
    %909 = vsyncpa %s908, 1

</llo_original>
